<compile_context>
chip_gen: v6e
topology: v6e:2x2x1
jax: 0.10.0
libtpu: 0.0.40
codegen_flags: <defaults>
</compile_context>

<pallas_src>
import jax
import jax.numpy as jnp
from jax.experimental import pallas as pl
from jax.experimental.pallas import tpu as pltpu


# ----------------------------------------------------------------------------
# Kernel helpers
# ----------------------------------------------------------------------------
def _zero_border(ref):
    """Zero only the 1-pixel padding ring of a (B, fh+2, fw+2, C) scratch.

    Done every grid step (NOT behind pl.when(program_id == 0)): with the batch
    axis sharded across TensorCores each core has its own private scratch, so
    per-step init is required for correctness.
    """
    bblk, hp2, wp2, c = ref.shape
    zrow = jnp.zeros((bblk, 1, wp2, c), ref.dtype)
    ref[:, 0:1, :, :] = zrow
    ref[:, hp2 - 1:hp2, :, :] = zrow
    zcol = jnp.zeros((bblk, hp2, 1, c), ref.dtype)
    ref[:, :, 0:1, :] = zcol
    ref[:, :, wp2 - 1:wp2, :] = zcol


# ----------------------------------------------------------------------------
# Fused FCN forward kernel: one grid step == B_blk images, everything in VMEM.
# ----------------------------------------------------------------------------
def _fcn_fused_kernel(x_ref, w1_ref, b1_ref, w2_ref, b2_ref, w3_ref, b3_ref,
                      w4_ref, b4_ref, bmt_ref, o_ref, pad1_ref, pad2_ref):
    f32, bf16 = jnp.float32, jnp.bfloat16
    bblk, fhw, k1 = x_ref.shape            # (B_blk, fh*fw, 9*cin padded)
    fh = pad1_ref.shape[1] - 2
    fw = pad1_ref.shape[2] - 2
    c1 = pad1_ref.shape[3]
    c2 = pad2_ref.shape[3]
    mm = bblk * fhw                        # MXU M dimension (all block images)

    # ---- conv1: 3x3 / stride 2 / pad 1 as ONE matmul over glue-side im2col --
    xcol = x_ref[...].reshape(mm, k1)                         # bf16 (M, K1)
    a1 = jnp.dot(xcol, w1_ref[...], preferred_element_type=f32) + b1_ref[...]
    a1 = jnp.maximum(a1, 0.0)                                 # (M, c1) f32

    # Padded copy in VMEM so conv2 taps are plain shifted slices; only the
    # border ring is zeroed (interior is fully overwritten right after).
    _zero_border(pad1_ref)
    pad1_ref[:, 1:fh + 1, 1:fw + 1, :] = a1.reshape(bblk, fh, fw, c1)

    def conv3x3(pad_ref, w_ref, b_ref, cin):
        # im2col slab: concatenate the 9 shifted taps along K -> ONE MXU dot.
        taps = []
        for di in range(3):
            for dj in range(3):
                t = pad_ref[:, di:di + fh, dj:dj + fw, :]     # (B, fh, fw, cin)
                taps.append(t.reshape(mm, cin))
        slab = jnp.concatenate(taps, axis=-1).astype(bf16)    # (M, 9*cin)
        acc = jnp.dot(slab, w_ref[...], preferred_element_type=f32) + b_ref[...]
        return jnp.maximum(acc, 0.0)                          # (M, cout) f32

    # ---- conv2: 3x3 / stride 1 / pad 1, c1 -> c2 (K = 9*c1) -----------------
    a2 = conv3x3(pad1_ref, w2_ref, b2_ref, c1)
    _zero_border(pad2_ref)
    pad2_ref[:, 1:fh + 1, 1:fw + 1, :] = a2.reshape(bblk, fh, fw, c2)

    # ---- conv3: 3x3 / stride 1 / pad 1, c2 -> c3 (K = 9*c2) -----------------
    a3 = conv3x3(pad2_ref, w3_ref, b3_ref, c2)

    # ---- conv4: 1x1 head, c3 -> num_classes (no ReLU) -----------------------
    z = jnp.dot(a3.astype(bf16), w4_ref[...],
                preferred_element_type=f32) + b4_ref[...]     # (M, ncls) f32

    # ---- bilinear upsample, channel-major output (lane-dense h*w stores) ----
    # y^T = z^T @ kron(Rh, Rw)^T : per image an (ncls, fh*fw) x (fh*fw, h*w) dot.
    bmt = bmt_ref[...]                                        # (fh*fw, h*w) bf16
    for b in range(bblk):
        zt = z[b * fhw:(b + 1) * fhw, :].T.astype(bf16)       # (ncls, fh*fw)
        o_ref[b] = jnp.dot(zt, bmt, preferred_element_type=f32)   # (ncls, h*w)


# ----------------------------------------------------------------------------
# Plain-JAX glue (layout prep only, no heavy compute)
# ----------------------------------------------------------------------------
def _bilinear_matrix(n_in, n_out):
    """Row-interpolation matrix for align_corners=False bilinear resize."""
    dst = jnp.arange(n_out, dtype=jnp.float32)
    src = jnp.clip((dst + 0.5) * (n_in / n_out) - 0.5, 0.0, n_in - 1)
    lo = jnp.floor(src).astype(jnp.int32)
    hi = jnp.minimum(lo + 1, n_in - 1)
    w_hi = src - lo.astype(jnp.float32)
    w_lo = 1.0 - w_hi
    m = jnp.zeros((n_out, n_in), jnp.float32)
    m = m.at[jnp.arange(n_out), lo].add(w_lo)
    m = m.at[jnp.arange(n_out), hi].add(w_hi)
    return m


def _pick_batch_block(n):
    for cand in (4, 2, 1):
        if n % cand == 0:
            return cand
    return 1


def init_params(key, in_ch=3, num_classes=8):
    ks = jax.random.split(key, 8)
    def w(k, kh, kw, cin, cout):
        return (0.1 * jax.random.normal(k, (kh, kw, cin, cout))).astype(jnp.float32)
    def b(k, cout):
        return (0.01 * jax.random.normal(k, (cout,))).astype(jnp.float32)
    return {
        "w1": w(ks[0], 3, 3, in_ch, 16), "b1": b(ks[1], 16),
        "w2": w(ks[2], 3, 3, 16, 32),    "b2": b(ks[3], 32),
        "w3": w(ks[4], 3, 3, 32, 32),    "b3": b(ks[5], 32),
        "w4": w(ks[6], 1, 1, 32, num_classes), "b4": b(ks[7], num_classes),
    }


def fcn_wrapper_forward(params, x_nchw):
    """FCNWrapper.forward: run the FCN and return output['out'] (NCHW logits)."""
    n, cin, h, w = x_nchw.shape
    assert h % 2 == 0 and w % 2 == 0, "toy FCN assumes even spatial dims"
    fh, fw = h // 2, w // 2
    c1 = params["w1"].shape[-1]
    c2 = params["w2"].shape[-1]
    c3 = params["w3"].shape[-1]
    ncls = params["w4"].shape[-1]
    bblk = _pick_batch_block(n)

    # conv1 im2col in glue (fixes the 3-wide-lane input block, feeds one dot).
    x = jnp.transpose(x_nchw, (0, 2, 3, 1)).astype(jnp.float32)      # NHWC
    xp = jnp.pad(x, ((0, 0), (1, 1), (1, 1), (0, 0)))
    taps = [xp[:, di:di + 2 * fh:2, dj:dj + 2 * fw:2, :]
            for di in range(3) for dj in range(3)]
    k1_raw = 9 * cin
    k1 = ((k1_raw + 31) // 32) * 32                                  # pad K to 32
    x_col = jnp.concatenate(taps, axis=-1).reshape(n, fh * fw, k1_raw)
    x_col = jnp.pad(x_col, ((0, 0), (0, 0), (0, k1 - k1_raw))).astype(jnp.bfloat16)

    # Flattened bf16 weights in im2col (di, dj, cin) order; f32 biases.
    w1 = jnp.pad(params["w1"].reshape(k1_raw, c1),
                 ((0, k1 - k1_raw), (0, 0))).astype(jnp.bfloat16)
    w2 = params["w2"].reshape(9 * c1, c2).astype(jnp.bfloat16)
    w3 = params["w3"].reshape(9 * c2, c3).astype(jnp.bfloat16)
    w4 = params["w4"].reshape(c3, ncls).astype(jnp.bfloat16)
    b1 = params["b1"].reshape(1, c1).astype(jnp.float32)
    b2 = params["b2"].reshape(1, c2).astype(jnp.float32)
    b3 = params["b3"].reshape(1, c3).astype(jnp.float32)
    b4 = params["b4"].reshape(1, ncls).astype(jnp.float32)

    # Transposed fused upsample operator kron(Rh, Rw)^T : (fh*fw, h*w), bf16.
    rh = _bilinear_matrix(fh, h)                                     # (h, fh)
    rw = _bilinear_matrix(fw, w)                                     # (w, fw)
    bmt = jnp.einsum("Oh,Pw->hwOP", rh, rw).reshape(fh * fw, h * w).astype(jnp.bfloat16)

    def _const_spec(arr):
        nd = arr.ndim
        return pl.BlockSpec(arr.shape, lambda i, _nd=nd: (0,) * _nd)

    out = pl.pallas_call(
        _fcn_fused_kernel,
        out_shape=jax.ShapeDtypeStruct((n, ncls, h * w), jnp.float32),
        grid_spec=pltpu.PrefetchScalarGridSpec(
            num_scalar_prefetch=0,
            grid=(n // bblk,),
            in_specs=[
                pl.BlockSpec((bblk, fh * fw, k1), lambda i: (i, 0, 0)),
                _const_spec(w1), _const_spec(b1),
                _const_spec(w2), _const_spec(b2),
                _const_spec(w3), _const_spec(b3),
                _const_spec(w4), _const_spec(b4),
                _const_spec(bmt),
            ],
            out_specs=pl.BlockSpec((bblk, ncls, h * w), lambda i: (i, 0, 0)),
            scratch_shapes=[
                pltpu.VMEM((bblk, fh + 2, fw + 2, c1), jnp.float32),  # padded a1
                pltpu.VMEM((bblk, fh + 2, fw + 2, c2), jnp.float32),  # padded a2
            ],
        ),
        compiler_params=pltpu.CompilerParams(
            dimension_semantics=("parallel",),       # batch blocks across TCs
            vmem_limit_bytes=32 * 1024 * 1024,
        ),
    )(x_col, w1, b1, w2, b2, w3, b3, w4, b4, bmt)

    # Output is already channel-major (N, C, H*W): just reshape to NCHW.
    return out.reshape(n, ncls, h, w)


# ----------------------------------------------------------------------------
# Pure-JAX f32 reference (same math, no Pallas) for a correctness spot-check.
# ----------------------------------------------------------------------------
def _conv2d_ref(x_nhwc, w_hwio, b, *, stride, padding, relu):
    kh, kw, cin, cout = w_hwio.shape
    n, h, w, _ = x_nhwc.shape
    ho = (h + 2 * padding - kh) // stride + 1
    wo = (w + 2 * padding - kw) // stride + 1
    xp = jnp.pad(x_nhwc, ((0, 0), (padding, padding), (padding, padding), (0, 0)))
    acc = jnp.zeros((n, ho, wo, cout), jnp.float32)
    for i in range(kh):
        for j in range(kw):
            tap = xp[:, i:i + stride * ho:stride, j:j + stride * wo:stride, :]
            acc = acc + jnp.einsum("nhwc,co->nhwo", tap, w_hwio[i, j],
                                   preferred_element_type=jnp.float32)
    acc = acc + b
    return jnp.maximum(acc, 0.0) if relu else acc


def fcn_forward_ref(params, x_nchw):
    x = jnp.transpose(x_nchw, (0, 2, 3, 1)).astype(jnp.float32)
    _, h, w, _ = x.shape
    a = _conv2d_ref(x, params["w1"], params["b1"], stride=2, padding=1, relu=True)
    a = _conv2d_ref(a, params["w2"], params["b2"], stride=1, padding=1, relu=True)
    a = _conv2d_ref(a, params["w3"], params["b3"], stride=1, padding=1, relu=True)
    z = _conv2d_ref(a, params["w4"], params["b4"], stride=1, padding=0, relu=False)
    rh = _bilinear_matrix(z.shape[1], h)
    rw = _bilinear_matrix(z.shape[2], w)
    y = jnp.einsum("Oh,nhwc->nOwc", rh, z)
    y = jnp.einsum("Pw,nOwc->nOPc", rw, y)
    return jnp.transpose(y, (0, 3, 1, 2))


if __name__ == "__main__":
    key = jax.random.PRNGKey(0)
    k_param, k_x = jax.random.split(key)

    NUM_CLASSES = 8
    params = init_params(k_param, in_ch=3, num_classes=NUM_CLASSES)
    x = jax.random.normal(k_x, (2, 3, 16, 16), dtype=jnp.float32)   # NCHW

    out = jax.jit(fcn_wrapper_forward)(params, x)
    out = jax.block_until_ready(out)
    assert out.shape == (2, NUM_CLASSES, 16, 16), out.shape

    ref = fcn_forward_ref(params, x)
    err = float(jnp.max(jnp.abs(out - ref)))
    # bf16 MXU operands with f32 accumulation: allow a slightly looser bound.
    assert err < 3e-2, f"max abs err {err}"

    print("KERNEL_OK")
</pallas_src>

<mosaic_0001>
module attributes {stable_mosaic.version = 11 : i64} {
  func.func private @main(%arg0: i32) attributes {dimension_semantics = [#tpu.dimension_semantics<core_parallel>], iteration_bounds = array<i64: 2>, tpu.core_type = #tpu.core_type<sc_scalar_subcore>, window_params = []} {
    return
  }
}

module attributes {stable_mosaic.version = 11 : i64} {
  func.func private @main(%arg0: i32) attributes {dimension_semantics = [#tpu.dimension_semantics<core_parallel>], iteration_bounds = array<i64: 2>, tpu.core_type = #tpu.core_type<sc_scalar_subcore>, window_params = []} {
    return
  }
}

module attributes {stable_mosaic.version = 11 : i64} {
  func.func @_fcn_fused_kernel(%arg0: i32, %arg1: memref<2x64x32xbf16, #tpu.memory_space<vmem>>, %arg2: memref<32x16xbf16, #tpu.memory_space<vmem>>, %arg3: memref<1x16xf32, #tpu.memory_space<vmem>>, %arg4: memref<144x32xbf16, #tpu.memory_space<vmem>>, %arg5: memref<1x32xf32, #tpu.memory_space<vmem>>, %arg6: memref<288x32xbf16, #tpu.memory_space<vmem>>, %arg7: memref<1x32xf32, #tpu.memory_space<vmem>>, %arg8: memref<32x8xbf16, #tpu.memory_space<vmem>>, %arg9: memref<1x8xf32, #tpu.memory_space<vmem>>, %arg10: memref<64x256xbf16, #tpu.memory_space<vmem>>, %arg11: memref<2x8x256xf32, #tpu.memory_space<vmem>>, %arg12: memref<2x10x10x16xf32, #tpu.memory_space<vmem>>, %arg13: memref<2x10x10x32xf32, #tpu.memory_space<vmem>>) attributes {dimension_semantics = [#tpu.dimension_semantics<parallel>], iteration_bounds = array<i64: 1>, scalar_prefetch = 0 : i64, scratch_operands = 2 : i64, tpu.core_type = #tpu.core_type<tc>, window_params = [{transform_indices = @transform_0, window_bounds = array<i64: 2, 64, 32>}, {pipeline_mode = #tpu.pipeline_mode<synchronous>, transform_indices = @transform_1, window_bounds = array<i64: 32, 16>}, {pipeline_mode = #tpu.pipeline_mode<synchronous>, transform_indices = @transform_2, window_bounds = array<i64: 1, 16>}, {pipeline_mode = #tpu.pipeline_mode<synchronous>, transform_indices = @transform_3, window_bounds = array<i64: 144, 32>}, {pipeline_mode = #tpu.pipeline_mode<synchronous>, transform_indices = @transform_4, window_bounds = array<i64: 1, 32>}, {pipeline_mode = #tpu.pipeline_mode<synchronous>, transform_indices = @transform_5, window_bounds = array<i64: 288, 32>}, {pipeline_mode = #tpu.pipeline_mode<synchronous>, transform_indices = @transform_6, window_bounds = array<i64: 1, 32>}, {pipeline_mode = #tpu.pipeline_mode<synchronous>, transform_indices = @transform_7, window_bounds = array<i64: 32, 8>}, {pipeline_mode = #tpu.pipeline_mode<synchronous>, transform_indices = @transform_8, window_bounds = array<i64: 1, 8>}, {pipeline_mode = #tpu.pipeline_mode<synchronous>, transform_indices = @transform_9, window_bounds = array<i64: 64, 256>}, {transform_indices = @transform_10, window_bounds = array<i64: 2, 8, 256>}]} {
    %c0 = arith.constant 0 : index
    %c0_0 = arith.constant 0 : index
    %c0_1 = arith.constant 0 : index
    %0 = vector.load %arg1[%c0, %c0_0, %c0_1] : memref<2x64x32xbf16, #tpu.memory_space<vmem>>, vector<2x64x32xbf16>
    %1 = vector.shape_cast %0 : vector<2x64x32xbf16> to vector<128x32xbf16>
    %c0_2 = arith.constant 0 : index
    %c0_3 = arith.constant 0 : index
    %2 = vector.load %arg2[%c0_2, %c0_3] : memref<32x16xbf16, #tpu.memory_space<vmem>>, vector<32x16xbf16>
    %cst = arith.constant dense<0.000000e+00> : vector<128x16xf32>
    %3 = tpu.matmul %1, %2, %cst {dimension_numbers = #tpu.dot_dimension_numbers<[1], [0], [0], [1], [0, 0, 1, 1], [], []>} : vector<128x32xbf16>, vector<32x16xbf16>, vector<128x16xf32> -> vector<128x16xf32>
    %c0_4 = arith.constant 0 : index
    %c0_5 = arith.constant 0 : index
    %4 = vector.load %arg3[%c0_4, %c0_5] : memref<1x16xf32, #tpu.memory_space<vmem>>, vector<1x16xf32>
    %5 = vector.broadcast %4 : vector<1x16xf32> to vector<128x16xf32>
    %6 = arith.addf %3, %5 : vector<128x16xf32>
    %cst_6 = arith.constant 0.000000e+00 : f32
    %7 = vector.broadcast %cst_6 : f32 to vector<128x16xf32>
    %8 = arith.maximumf %6, %7 : vector<128x16xf32>
    %cst_7 = arith.constant 0.000000e+00 : f32
    %9 = vector.broadcast %cst_7 : f32 to vector<2x1x10x16xf32>
    %c0_8 = arith.constant 0 : index
    %c0_9 = arith.constant 0 : index
    %c0_10 = arith.constant 0 : index
    %c0_11 = arith.constant 0 : index
    %10 = vector.load %arg12[%c0_8, %c0_9, %c0_10, %c0_11] : memref<2x10x10x16xf32, #tpu.memory_space<vmem>>, vector<2x1x10x16xf32>
    tpu.vector_store %arg12[%c0_8, %c0_9, %c0_10, %c0_11], %9 {strides = array<i32>} : memref<2x10x10x16xf32, #tpu.memory_space<vmem>>, vector<2x1x10x16xf32>,
    %c0_12 = arith.constant 0 : index
    %c9 = arith.constant 9 : index
    %c0_13 = arith.constant 0 : index
    %c0_14 = arith.constant 0 : index
    %11 = vector.load %arg12[%c0_12, %c9, %c0_13, %c0_14] : memref<2x10x10x16xf32, #tpu.memory_space<vmem>>, vector<2x1x10x16xf32>
    tpu.vector_store %arg12[%c0_12, %c9, %c0_13, %c0_14], %9 {strides = array<i32>} : memref<2x10x10x16xf32, #tpu.memory_space<vmem>>, vector<2x1x10x16xf32>,
    %cst_15 = arith.constant 0.000000e+00 : f32
    %12 = vector.broadcast %cst_15 : f32 to vector<2x10x1x16xf32>
    %c0_16 = arith.constant 0 : index
    %c0_17 = arith.constant 0 : index
    %c0_18 = arith.constant 0 : index
    %c0_19 = arith.constant 0 : index
    %13 = vector.load %arg12[%c0_16, %c0_17, %c0_18, %c0_19] : memref<2x10x10x16xf32, #tpu.memory_space<vmem>>, vector<2x10x1x16xf32>
    tpu.vector_store %arg12[%c0_16, %c0_17, %c0_18, %c0_19], %12 {strides = array<i32>} : memref<2x10x10x16xf32, #tpu.memory_space<vmem>>, vector<2x10x1x16xf32>,
    %c0_20 = arith.constant 0 : index
    %c0_21 = arith.constant 0 : index
    %c9_22 = arith.constant 9 : index
    %c0_23 = arith.constant 0 : index
    %14 = vector.load %arg12[%c0_20, %c0_21, %c9_22, %c0_23] : memref<2x10x10x16xf32, #tpu.memory_space<vmem>>, vector<2x10x1x16xf32>
    tpu.vector_store %arg12[%c0_20, %c0_21, %c9_22, %c0_23], %12 {strides = array<i32>} : memref<2x10x10x16xf32, #tpu.memory_space<vmem>>, vector<2x10x1x16xf32>,
    %15 = vector.shape_cast %8 : vector<128x16xf32> to vector<2x8x8x16xf32>
    %c0_24 = arith.constant 0 : index
    %c1 = arith.constant 1 : index
    %c1_25 = arith.constant 1 : index
    %c0_26 = arith.constant 0 : index
    %16 = vector.load %arg12[%c0_24, %c1, %c1_25, %c0_26] : memref<2x10x10x16xf32, #tpu.memory_space<vmem>>, vector<2x8x8x16xf32>
    tpu.vector_store %arg12[%c0_24, %c1, %c1_25, %c0_26], %15 {strides = array<i32>} : memref<2x10x10x16xf32, #tpu.memory_space<vmem>>, vector<2x8x8x16xf32>,
    %c0_27 = arith.constant 0 : index
    %c0_28 = arith.constant 0 : index
    %c0_29 = arith.constant 0 : index
    %c0_30 = arith.constant 0 : index
    %17 = vector.load %arg12[%c0_27, %c0_28, %c0_29, %c0_30] : memref<2x10x10x16xf32, #tpu.memory_space<vmem>>, vector<2x8x8x16xf32>
    %18 = vector.shape_cast %17 : vector<2x8x8x16xf32> to vector<128x16xf32>
    %c0_31 = arith.constant 0 : index
    %c0_32 = arith.constant 0 : index
    %c1_33 = arith.constant 1 : index
    %c0_34 = arith.constant 0 : index
    %19 = vector.load %arg12[%c0_31, %c0_32, %c1_33, %c0_34] : memref<2x10x10x16xf32, #tpu.memory_space<vmem>>, vector<2x8x8x16xf32>
    %20 = vector.shape_cast %19 : vector<2x8x8x16xf32> to vector<128x16xf32>
    %c0_35 = arith.constant 0 : index
    %c0_36 = arith.constant 0 : index
    %c2 = arith.constant 2 : index
    %c0_37 = arith.constant 0 : index
    %21 = vector.load %arg12[%c0_35, %c0_36, %c2, %c0_37] : memref<2x10x10x16xf32, #tpu.memory_space<vmem>>, vector<2x8x8x16xf32>
    %22 = vector.shape_cast %21 : vector<2x8x8x16xf32> to vector<128x16xf32>
    %c0_38 = arith.constant 0 : index
    %c1_39 = arith.constant 1 : index
    %c0_40 = arith.constant 0 : index
    %c0_41 = arith.constant 0 : index
    %23 = vector.load %arg12[%c0_38, %c1_39, %c0_40, %c0_41] : memref<2x10x10x16xf32, #tpu.memory_space<vmem>>, vector<2x8x8x16xf32>
    %24 = vector.shape_cast %23 : vector<2x8x8x16xf32> to vector<128x16xf32>
    %c0_42 = arith.constant 0 : index
    %c1_43 = arith.constant 1 : index
    %c1_44 = arith.constant 1 : index
    %c0_45 = arith.constant 0 : index
    %25 = vector.load %arg12[%c0_42, %c1_43, %c1_44, %c0_45] : memref<2x10x10x16xf32, #tpu.memory_space<vmem>>, vector<2x8x8x16xf32>
    %26 = vector.shape_cast %25 : vector<2x8x8x16xf32> to vector<128x16xf32>
    %c0_46 = arith.constant 0 : index
    %c1_47 = arith.constant 1 : index
    %c2_48 = arith.constant 2 : index
    %c0_49 = arith.constant 0 : index
    %27 = vector.load %arg12[%c0_46, %c1_47, %c2_48, %c0_49] : memref<2x10x10x16xf32, #tpu.memory_space<vmem>>, vector<2x8x8x16xf32>
    %28 = vector.shape_cast %27 : vector<2x8x8x16xf32> to vector<128x16xf32>
    %c0_50 = arith.constant 0 : index
    %c2_51 = arith.constant 2 : index
    %c0_52 = arith.constant 0 : index
    %c0_53 = arith.constant 0 : index
    %29 = vector.load %arg12[%c0_50, %c2_51, %c0_52, %c0_53] : memref<2x10x10x16xf32, #tpu.memory_space<vmem>>, vector<2x8x8x16xf32>
    %30 = vector.shape_cast %29 : vector<2x8x8x16xf32> to vector<128x16xf32>
    %c0_54 = arith.constant 0 : index
    %c2_55 = arith.constant 2 : index
    %c1_56 = arith.constant 1 : index
    %c0_57 = arith.constant 0 : index
    %31 = vector.load %arg12[%c0_54, %c2_55, %c1_56, %c0_57] : memref<2x10x10x16xf32, #tpu.memory_space<vmem>>, vector<2x8x8x16xf32>
    %32 = vector.shape_cast %31 : vector<2x8x8x16xf32> to vector<128x16xf32>
    %c0_58 = arith.constant 0 : index
    %c2_59 = arith.constant 2 : index
    %c2_60 = arith.constant 2 : index
    %c0_61 = arith.constant 0 : index
    %33 = vector.load %arg12[%c0_58, %c2_59, %c2_60, %c0_61] : memref<2x10x10x16xf32, #tpu.memory_space<vmem>>, vector<2x8x8x16xf32>
    %34 = vector.shape_cast %33 : vector<2x8x8x16xf32> to vector<128x16xf32>
    %35 = tpu.concatenate %18, %20, %22, %24, %26, %28, %30, %32, %34 in 1 : vector<128x16xf32>, vector<128x16xf32>, vector<128x16xf32>, vector<128x16xf32>, vector<128x16xf32>, vector<128x16xf32>, vector<128x16xf32>, vector<128x16xf32>, vector<128x16xf32> -> vector<128x144xf32>
    %36 = arith.truncf %35 : vector<128x144xf32> to vector<128x144xbf16>
    %c0_62 = arith.constant 0 : index
    %c0_63 = arith.constant 0 : index
    %37 = vector.load %arg4[%c0_62, %c0_63] : memref<144x32xbf16, #tpu.memory_space<vmem>>, vector<144x32xbf16>
    %cst_64 = arith.constant dense<0.000000e+00> : vector<128x32xf32>
    %38 = tpu.matmul %36, %37, %cst_64 {dimension_numbers = #tpu.dot_dimension_numbers<[1], [0], [0], [1], [0, 0, 1, 1], [], []>} : vector<128x144xbf16>, vector<144x32xbf16>, vector<128x32xf32> -> vector<128x32xf32>
    %c0_65 = arith.constant 0 : index
    %c0_66 = arith.constant 0 : index
    %39 = vector.load %arg5[%c0_65, %c0_66] : memref<1x32xf32, #tpu.memory_space<vmem>>, vector<1x32xf32>
    %40 = vector.broadcast %39 : vector<1x32xf32> to vector<128x32xf32>
    %41 = arith.addf %38, %40 : vector<128x32xf32>
    %cst_67 = arith.constant 0.000000e+00 : f32
    %42 = vector.broadcast %cst_67 : f32 to vector<128x32xf32>
    %43 = arith.maximumf %41, %42 : vector<128x32xf32>
    %cst_68 = arith.constant 0.000000e+00 : f32
    %44 = vector.broadcast %cst_68 : f32 to vector<2x1x10x32xf32>
    %c0_69 = arith.constant 0 : index
    %c0_70 = arith.constant 0 : index
    %c0_71 = arith.constant 0 : index
    %c0_72 = arith.constant 0 : index
    %45 = vector.load %arg13[%c0_69, %c0_70, %c0_71, %c0_72] : memref<2x10x10x32xf32, #tpu.memory_space<vmem>>, vector<2x1x10x32xf32>
    tpu.vector_store %arg13[%c0_69, %c0_70, %c0_71, %c0_72], %44 {strides = array<i32>} : memref<2x10x10x32xf32, #tpu.memory_space<vmem>>, vector<2x1x10x32xf32>,
    %c0_73 = arith.constant 0 : index
    %c9_74 = arith.constant 9 : index
    %c0_75 = arith.constant 0 : index
    %c0_76 = arith.constant 0 : index
    %46 = vector.load %arg13[%c0_73, %c9_74, %c0_75, %c0_76] : memref<2x10x10x32xf32, #tpu.memory_space<vmem>>, vector<2x1x10x32xf32>
    tpu.vector_store %arg13[%c0_73, %c9_74, %c0_75, %c0_76], %44 {strides = array<i32>} : memref<2x10x10x32xf32, #tpu.memory_space<vmem>>, vector<2x1x10x32xf32>,
    %cst_77 = arith.constant 0.000000e+00 : f32
    %47 = vector.broadcast %cst_77 : f32 to vector<2x10x1x32xf32>
    %c0_78 = arith.constant 0 : index
    %c0_79 = arith.constant 0 : index
    %c0_80 = arith.constant 0 : index
    %c0_81 = arith.constant 0 : index
    %48 = vector.load %arg13[%c0_78, %c0_79, %c0_80, %c0_81] : memref<2x10x10x32xf32, #tpu.memory_space<vmem>>, vector<2x10x1x32xf32>
    tpu.vector_store %arg13[%c0_78, %c0_79, %c0_80, %c0_81], %47 {strides = array<i32>} : memref<2x10x10x32xf32, #tpu.memory_space<vmem>>, vector<2x10x1x32xf32>,
    %c0_82 = arith.constant 0 : index
    %c0_83 = arith.constant 0 : index
    %c9_84 = arith.constant 9 : index
    %c0_85 = arith.constant 0 : index
    %49 = vector.load %arg13[%c0_82, %c0_83, %c9_84, %c0_85] : memref<2x10x10x32xf32, #tpu.memory_space<vmem>>, vector<2x10x1x32xf32>
    tpu.vector_store %arg13[%c0_82, %c0_83, %c9_84, %c0_85], %47 {strides = array<i32>} : memref<2x10x10x32xf32, #tpu.memory_space<vmem>>, vector<2x10x1x32xf32>,
    %50 = vector.shape_cast %43 : vector<128x32xf32> to vector<2x8x8x32xf32>
    %c0_86 = arith.constant 0 : index
    %c1_87 = arith.constant 1 : index
    %c1_88 = arith.constant 1 : index
    %c0_89 = arith.constant 0 : index
    %51 = vector.load %arg13[%c0_86, %c1_87, %c1_88, %c0_89] : memref<2x10x10x32xf32, #tpu.memory_space<vmem>>, vector<2x8x8x32xf32>
    tpu.vector_store %arg13[%c0_86, %c1_87, %c1_88, %c0_89], %50 {strides = array<i32>} : memref<2x10x10x32xf32, #tpu.memory_space<vmem>>, vector<2x8x8x32xf32>,
    %c0_90 = arith.constant 0 : index
    %c0_91 = arith.constant 0 : index
    %c0_92 = arith.constant 0 : index
    %c0_93 = arith.constant 0 : index
    %52 = vector.load %arg13[%c0_90, %c0_91, %c0_92, %c0_93] : memref<2x10x10x32xf32, #tpu.memory_space<vmem>>, vector<2x8x8x32xf32>
    %53 = vector.shape_cast %52 : vector<2x8x8x32xf32> to vector<128x32xf32>
    %c0_94 = arith.constant 0 : index
    %c0_95 = arith.constant 0 : index
    %c1_96 = arith.constant 1 : index
    %c0_97 = arith.constant 0 : index
    %54 = vector.load %arg13[%c0_94, %c0_95, %c1_96, %c0_97] : memref<2x10x10x32xf32, #tpu.memory_space<vmem>>, vector<2x8x8x32xf32>
    %55 = vector.shape_cast %54 : vector<2x8x8x32xf32> to vector<128x32xf32>
    %c0_98 = arith.constant 0 : index
    %c0_99 = arith.constant 0 : index
    %c2_100 = arith.constant 2 : index
    %c0_101 = arith.constant 0 : index
    %56 = vector.load %arg13[%c0_98, %c0_99, %c2_100, %c0_101] : memref<2x10x10x32xf32, #tpu.memory_space<vmem>>, vector<2x8x8x32xf32>
    %57 = vector.shape_cast %56 : vector<2x8x8x32xf32> to vector<128x32xf32>
    %c0_102 = arith.constant 0 : index
    %c1_103 = arith.constant 1 : index
    %c0_104 = arith.constant 0 : index
    %c0_105 = arith.constant 0 : index
    %58 = vector.load %arg13[%c0_102, %c1_103, %c0_104, %c0_105] : memref<2x10x10x32xf32, #tpu.memory_space<vmem>>, vector<2x8x8x32xf32>
    %59 = vector.shape_cast %58 : vector<2x8x8x32xf32> to vector<128x32xf32>
    %c0_106 = arith.constant 0 : index
    %c1_107 = arith.constant 1 : index
    %c1_108 = arith.constant 1 : index
    %c0_109 = arith.constant 0 : index
    %60 = vector.load %arg13[%c0_106, %c1_107, %c1_108, %c0_109] : memref<2x10x10x32xf32, #tpu.memory_space<vmem>>, vector<2x8x8x32xf32>
    %61 = vector.shape_cast %60 : vector<2x8x8x32xf32> to vector<128x32xf32>
    %c0_110 = arith.constant 0 : index
    %c1_111 = arith.constant 1 : index
    %c2_112 = arith.constant 2 : index
    %c0_113 = arith.constant 0 : index
    %62 = vector.load %arg13[%c0_110, %c1_111, %c2_112, %c0_113] : memref<2x10x10x32xf32, #tpu.memory_space<vmem>>, vector<2x8x8x32xf32>
    %63 = vector.shape_cast %62 : vector<2x8x8x32xf32> to vector<128x32xf32>
    %c0_114 = arith.constant 0 : index
    %c2_115 = arith.constant 2 : index
    %c0_116 = arith.constant 0 : index
    %c0_117 = arith.constant 0 : index
    %64 = vector.load %arg13[%c0_114, %c2_115, %c0_116, %c0_117] : memref<2x10x10x32xf32, #tpu.memory_space<vmem>>, vector<2x8x8x32xf32>
    %65 = vector.shape_cast %64 : vector<2x8x8x32xf32> to vector<128x32xf32>
    %c0_118 = arith.constant 0 : index
    %c2_119 = arith.constant 2 : index
    %c1_120 = arith.constant 1 : index
    %c0_121 = arith.constant 0 : index
    %66 = vector.load %arg13[%c0_118, %c2_119, %c1_120, %c0_121] : memref<2x10x10x32xf32, #tpu.memory_space<vmem>>, vector<2x8x8x32xf32>
    %67 = vector.shape_cast %66 : vector<2x8x8x32xf32> to vector<128x32xf32>
    %c0_122 = arith.constant 0 : index
    %c2_123 = arith.constant 2 : index
    %c2_124 = arith.constant 2 : index
    %c0_125 = arith.constant 0 : index
    %68 = vector.load %arg13[%c0_122, %c2_123, %c2_124, %c0_125] : memref<2x10x10x32xf32, #tpu.memory_space<vmem>>, vector<2x8x8x32xf32>
    %69 = vector.shape_cast %68 : vector<2x8x8x32xf32> to vector<128x32xf32>
    %70 = tpu.concatenate %53, %55, %57, %59, %61, %63, %65, %67, %69 in 1 : vector<128x32xf32>, vector<128x32xf32>, vector<128x32xf32>, vector<128x32xf32>, vector<128x32xf32>, vector<128x32xf32>, vector<128x32xf32>, vector<128x32xf32>, vector<128x32xf32> -> vector<128x288xf32>
    %71 = arith.truncf %70 : vector<128x288xf32> to vector<128x288xbf16>
    %c0_126 = arith.constant 0 : index
    %c0_127 = arith.constant 0 : index
    %72 = vector.load %arg6[%c0_126, %c0_127] : memref<288x32xbf16, #tpu.memory_space<vmem>>, vector<288x32xbf16>
    %cst_128 = arith.constant dense<0.000000e+00> : vector<128x32xf32>
    %73 = tpu.matmul %71, %72, %cst_128 {dimension_numbers = #tpu.dot_dimension_numbers<[1], [0], [0], [1], [0, 0, 1, 1], [], []>} : vector<128x288xbf16>, vector<288x32xbf16>, vector<128x32xf32> -> vector<128x32xf32>
    %c0_129 = arith.constant 0 : index
    %c0_130 = arith.constant 0 : index
    %74 = vector.load %arg7[%c0_129, %c0_130] : memref<1x32xf32, #tpu.memory_space<vmem>>, vector<1x32xf32>
    %75 = vector.broadcast %74 : vector<1x32xf32> to vector<128x32xf32>
    %76 = arith.addf %73, %75 : vector<128x32xf32>
    %cst_131 = arith.constant 0.000000e+00 : f32
    %77 = vector.broadcast %cst_131 : f32 to vector<128x32xf32>
    %78 = arith.maximumf %76, %77 : vector<128x32xf32>
    %79 = arith.truncf %78 : vector<128x32xf32> to vector<128x32xbf16>
    %c0_132 = arith.constant 0 : index
    %c0_133 = arith.constant 0 : index
    %80 = vector.load %arg8[%c0_132, %c0_133] : memref<32x8xbf16, #tpu.memory_space<vmem>>, vector<32x8xbf16>
    %cst_134 = arith.constant dense<0.000000e+00> : vector<128x8xf32>
    %81 = tpu.matmul %79, %80, %cst_134 {dimension_numbers = #tpu.dot_dimension_numbers<[1], [0], [0], [1], [0, 0, 1, 1], [], []>} : vector<128x32xbf16>, vector<32x8xbf16>, vector<128x8xf32> -> vector<128x8xf32>
    %c0_135 = arith.constant 0 : index
    %c0_136 = arith.constant 0 : index
    %82 = vector.load %arg9[%c0_135, %c0_136] : memref<1x8xf32, #tpu.memory_space<vmem>>, vector<1x8xf32>
    %83 = vector.broadcast %82 : vector<1x8xf32> to vector<128x8xf32>
    %84 = arith.addf %81, %83 : vector<128x8xf32>
    %c0_137 = arith.constant 0 : index
    %c0_138 = arith.constant 0 : index
    %85 = vector.load %arg10[%c0_137, %c0_138] : memref<64x256xbf16, #tpu.memory_space<vmem>>, vector<64x256xbf16>
    %86 = vector.extract_strided_slice %84 {offsets = [0, 0], sizes = [64, 8], strides = [1, 1]} : vector<128x8xf32> to vector<64x8xf32>
    %87 = tpu.transpose %86, [1, 0] : vector<64x8xf32> -> vector<8x64xf32>
    %88 = arith.truncf %87 : vector<8x64xf32> to vector<8x64xbf16>
    %cst_139 = arith.constant dense<0.000000e+00> : vector<8x256xf32>
    %89 = tpu.matmul %88, %85, %cst_139 {dimension_numbers = #tpu.dot_dimension_numbers<[1], [0], [0], [1], [0, 0, 1, 1], [], []>} : vector<8x64xbf16>, vector<64x256xbf16>, vector<8x256xf32> -> vector<8x256xf32>
    %c0_140 = arith.constant 0 : index
    %c0_141 = arith.constant 0 : index
    %c0_142 = arith.constant 0 : index
    %90 = vector.load %arg11[%c0_140, %c0_141, %c0_142] : memref<2x8x256xf32, #tpu.memory_space<vmem>>, vector<1x8x256xf32>
    %91 = vector.shape_cast %90 : vector<1x8x256xf32> to vector<8x256xf32>
    %92 = vector.shape_cast %89 : vector<8x256xf32> to vector<1x8x256xf32>
    tpu.vector_store %arg11[%c0_140, %c0_141, %c0_142], %92 {strides = array<i32>} : memref<2x8x256xf32, #tpu.memory_space<vmem>>, vector<1x8x256xf32>,
    %93 = vector.extract_strided_slice %84 {offsets = [64, 0], sizes = [64, 8], strides = [1, 1]} : vector<128x8xf32> to vector<64x8xf32>
    %94 = tpu.transpose %93, [1, 0] : vector<64x8xf32> -> vector<8x64xf32>
    %95 = arith.truncf %94 : vector<8x64xf32> to vector<8x64xbf16>
    %cst_143 = arith.constant dense<0.000000e+00> : vector<8x256xf32>
    %96 = tpu.matmul %95, %85, %cst_143 {dimension_numbers = #tpu.dot_dimension_numbers<[1], [0], [0], [1], [0, 0, 1, 1], [], []>} : vector<8x64xbf16>, vector<64x256xbf16>, vector<8x256xf32> -> vector<8x256xf32>
    %c1_144 = arith.constant 1 : index
    %c0_145 = arith.constant 0 : index
    %c0_146 = arith.constant 0 : index
    %97 = vector.load %arg11[%c1_144, %c0_145, %c0_146] : memref<2x8x256xf32, #tpu.memory_space<vmem>>, vector<1x8x256xf32>
    %98 = vector.shape_cast %97 : vector<1x8x256xf32> to vector<8x256xf32>
    %99 = vector.shape_cast %96 : vector<8x256xf32> to vector<1x8x256xf32>
    tpu.vector_store %arg11[%c1_144, %c0_145, %c0_146], %99 {strides = array<i32>} : memref<2x8x256xf32, #tpu.memory_space<vmem>>, vector<1x8x256xf32>,
    return
  }
  func.func @transform_0(%arg0: i32) -> (i32, i32, i32) {
    %c0_i32 = arith.constant 0 : i32
    %c0_i32_0 = arith.constant 0 : i32
    %c0_i32_1 = arith.constant 0 : i32
    return %arg0, %c0_i32, %c0_i32_0 : i32, i32, i32
  }
  func.func @transform_1(%arg0: i32) -> (i32, i32) {
    %c0_i32 = arith.constant 0 : i32
    %c0_i32_0 = arith.constant 0 : i32
    %c0_i32_1 = arith.constant 0 : i32
    return %c0_i32, %c0_i32_0 : i32, i32
  }
  func.func @transform_2(%arg0: i32) -> (i32, i32) {
    %c0_i32 = arith.constant 0 : i32
    %c0_i32_0 = arith.constant 0 : i32
    %c0_i32_1 = arith.constant 0 : i32
    return %c0_i32, %c0_i32_0 : i32, i32
  }
  func.func @transform_3(%arg0: i32) -> (i32, i32) {
    %c0_i32 = arith.constant 0 : i32
    %c0_i32_0 = arith.constant 0 : i32
    %c0_i32_1 = arith.constant 0 : i32
    return %c0_i32, %c0_i32_0 : i32, i32
  }
  func.func @transform_4(%arg0: i32) -> (i32, i32) {
    %c0_i32 = arith.constant 0 : i32
    %c0_i32_0 = arith.constant 0 : i32
    %c0_i32_1 = arith.constant 0 : i32
    return %c0_i32, %c0_i32_0 : i32, i32
  }
  func.func @transform_5(%arg0: i32) -> (i32, i32) {
    %c0_i32 = arith.constant 0 : i32
    %c0_i32_0 = arith.constant 0 : i32
    %c0_i32_1 = arith.constant 0 : i32
    return %c0_i32, %c0_i32_0 : i32, i32
  }
  func.func @transform_6(%arg0: i32) -> (i32, i32) {
    %c0_i32 = arith.constant 0 : i32
    %c0_i32_0 = arith.constant 0 : i32
    %c0_i32_1 = arith.constant 0 : i32
    return %c0_i32, %c0_i32_0 : i32, i32
  }
  func.func @transform_7(%arg0: i32) -> (i32, i32) {
    %c0_i32 = arith.constant 0 : i32
    %c0_i32_0 = arith.constant 0 : i32
    %c0_i32_1 = arith.constant 0 : i32
    return %c0_i32, %c0_i32_0 : i32, i32
  }
  func.func @transform_8(%arg0: i32) -> (i32, i32) {
    %c0_i32 = arith.constant 0 : i32
    %c0_i32_0 = arith.constant 0 : i32
    %c0_i32_1 = arith.constant 0 : i32
    return %c0_i32, %c0_i32_0 : i32, i32
  }
  func.func @transform_9(%arg0: i32) -> (i32, i32) {
    %c0_i32 = arith.constant 0 : i32
    %c0_i32_0 = arith.constant 0 : i32
    %c0_i32_1 = arith.constant 0 : i32
    return %c0_i32, %c0_i32_0 : i32, i32
  }
  func.func @transform_10(%arg0: i32) -> (i32, i32, i32) {
    %c0_i32 = arith.constant 0 : i32
    %c0_i32_0 = arith.constant 0 : i32
    %c0_i32_1 = arith.constant 0 : i32
    return %arg0, %c0_i32, %c0_i32_0 : i32, i32, i32
  }
}

</mosaic_0001>

<llo_original>
// kernel: fcn_wrapper_forward.1
$region0: #{fcn_wrapper_forward.1}
  #allocation0 [shape = 'u32[]', space=smem, size = 0x4, offset = 0x4, fixed_abs, tag = 'smem constant byte address 0x4 - core index']
  #allocation1 [shape = 'u32[144,128]{1,0:T(1,128)}', space=vmem, size = 0x12000, scoped, tag = 'internal scratch']
  #allocation2 [shape = 'f32[2,10,10,16]{3,2,1,0:T(8,128)}', space=vmem, size = 0x28000, scoped, tag = 'scratch operand']
  #allocation3 [shape = 'f32[2,10,10,32]{3,2,1,0:T(8,128)}', space=vmem, size = 0x28000, scoped, tag = 'scratch operand']
  %s0 = inlined_call_operand.vmem [shape: bf16[2,64,32], index: 0, kind: input, shape index: {}]
  %s1 = inlined_call_operand.vmem [shape: bf16[32,16], index: 1, kind: input, shape index: {}]
  %s2 = inlined_call_operand.vmem [shape: f32[1,16], index: 2, kind: input, shape index: {}]
  %s3 = inlined_call_operand.vmem [shape: bf16[144,32], index: 3, kind: input, shape index: {}]
  %s4 = inlined_call_operand.vmem [shape: f32[1,32], index: 4, kind: input, shape index: {}]
  %s5 = inlined_call_operand.vmem [shape: bf16[288,32], index: 5, kind: input, shape index: {}]
  %s6 = inlined_call_operand.vmem [shape: f32[1,32], index: 6, kind: input, shape index: {}]
  %s7 = inlined_call_operand.vmem [shape: bf16[32,8], index: 7, kind: input, shape index: {}]
  %s8 = inlined_call_operand.vmem [shape: f32[1,8], index: 8, kind: input, shape index: {}]
  %s9 = inlined_call_operand.vmem [shape: bf16[64,256], index: 9, kind: input, shape index: {}]
  %s10 = inlined_call_operand.vmem [shape: f32[2,8,256], index: 10, kind: output, shape index: {}]
  %s11 = sld [smem:[#allocation0]]
  $region50: #{fcn_wrapper_forward.1} parent=0
    _
  %s13 = ssub.s32 1, %s11
  %s14 = scalar_select 0, %s13, %s11
  // Predicated region
  $region2: #{fcn_wrapper_forward.1} parent=0 // pred_check
    _
  $region3: #{fcn_wrapper_forward.1} parent=0 // pred_check_branch
    %16 = sbr.rel (0) target = $region5
  $region4: #{fcn_wrapper_forward.1} parent=0 // pred_region
    _
  $region5: #{fcn_wrapper_forward.1} parent=0 // pred_fallthru
    _
  // Predicated region
  $region6: #{fcn_wrapper_forward.1} parent=0 // pred_check
    _
  $region7: #{fcn_wrapper_forward.1} parent=0 // pred_check_branch
    %18 = sbr.rel (0) target = $region9
  $region8: #{fcn_wrapper_forward.1} parent=0 // pred_region
    _
  $region9: #{fcn_wrapper_forward.1} parent=0 // pred_fallthru
    _
  // Predicated region
  $region10: #{fcn_wrapper_forward.1} parent=0 // pred_check
    _
  $region11: #{fcn_wrapper_forward.1} parent=0 // pred_check_branch
    %20 = sbr.rel (0) target = $region13
  $region12: #{fcn_wrapper_forward.1} parent=0 // pred_region
    _
  $region13: #{fcn_wrapper_forward.1} parent=0 // pred_fallthru
    _
  // Predicated region
  $region14: #{fcn_wrapper_forward.1} parent=0 // pred_check
    _
  $region15: #{fcn_wrapper_forward.1} parent=0 // pred_check_branch
    %22 = sbr.rel (0) target = $region17
  $region16: #{fcn_wrapper_forward.1} parent=0 // pred_region
    _
  $region17: #{fcn_wrapper_forward.1} parent=0 // pred_fallthru
    _
  // Predicated region
  $region18: #{fcn_wrapper_forward.1} parent=0 // pred_check
    _
  $region19: #{fcn_wrapper_forward.1} parent=0 // pred_check_branch
    %24 = sbr.rel (0) target = $region21
  $region20: #{fcn_wrapper_forward.1} parent=0 // pred_region
    _
  $region21: #{fcn_wrapper_forward.1} parent=0 // pred_fallthru
    _
  // Predicated region
  $region22: #{fcn_wrapper_forward.1} parent=0 // pred_check
    _
  $region23: #{fcn_wrapper_forward.1} parent=0 // pred_check_branch
    %26 = sbr.rel (0) target = $region25
  $region24: #{fcn_wrapper_forward.1} parent=0 // pred_region
    _
  $region25: #{fcn_wrapper_forward.1} parent=0 // pred_fallthru
    _
  // Predicated region
  $region26: #{fcn_wrapper_forward.1} parent=0 // pred_check
    _
  $region27: #{fcn_wrapper_forward.1} parent=0 // pred_check_branch
    %28 = sbr.rel (0) target = $region29
  $region28: #{fcn_wrapper_forward.1} parent=0 // pred_region
    _
  $region29: #{fcn_wrapper_forward.1} parent=0 // pred_fallthru
    _
  // Predicated region
  $region30: #{fcn_wrapper_forward.1} parent=0 // pred_check
    _
  $region31: #{fcn_wrapper_forward.1} parent=0 // pred_check_branch
    %30 = sbr.rel (0) target = $region33
  $region32: #{fcn_wrapper_forward.1} parent=0 // pred_region
    _
  $region33: #{fcn_wrapper_forward.1} parent=0 // pred_fallthru
    _
  // Predicated region
  $region34: #{fcn_wrapper_forward.1} parent=0 // pred_check
    _
  $region35: #{fcn_wrapper_forward.1} parent=0 // pred_check_branch
    %32 = sbr.rel (0) target = $region37
  $region36: #{fcn_wrapper_forward.1} parent=0 // pred_region
    _
  $region37: #{fcn_wrapper_forward.1} parent=0 // pred_fallthru
    _
  // Predicated region
  $region38: #{fcn_wrapper_forward.1} parent=0 // pred_check
    _
  $region39: #{fcn_wrapper_forward.1} parent=0 // pred_check_branch
    %34 = sbr.rel (0) target = $region41
  $region40: #{fcn_wrapper_forward.1} parent=0 // pred_region
    _
  $region41: #{fcn_wrapper_forward.1} parent=0 // pred_fallthru
    _
  %v36 = vld [vmem:[%s0] sm:$0xf]
  %v37 = vld [vmem:[%s0 + $0x4] sm:$0xf]
  %v38 = vld [vmem:[%s0 + $0x8] sm:$0xf]
  %v39 = vld [vmem:[%s0 + $0xc] sm:$0xf]
  %v40 = vld [vmem:[%s0 + $0x10] sm:$0xf]
  %v41 = vld [vmem:[%s0 + $0x14] sm:$0xf]
  %v42 = vld [vmem:[%s0 + $0x18] sm:$0xf]
  %v43 = vld [vmem:[%s0 + $0x1c] sm:$0xf]
  %v44 = vld [vmem:[%s0 + $0x20] sm:$0xf]
  %v45 = vld [vmem:[%s0 + $0x24] sm:$0xf]
  %v46 = vld [vmem:[%s0 + $0x28] sm:$0xf]
  %v47 = vld [vmem:[%s0 + $0x2c] sm:$0xf]
  %v48 = vld [vmem:[%s0 + $0x30] sm:$0xf]
  %v49 = vld [vmem:[%s0 + $0x34] sm:$0xf]
  %v50 = vld [vmem:[%s0 + $0x38] sm:$0xf]
  %v51 = vld [vmem:[%s0 + $0x3c] sm:$0xf]
  %v52 = vld [vmem:[%s1] sm:$0xf]
  %v53 = vld [vmem:[%s1 + $0x4] sm:$0xf]
  %v54 = vld [vmem:[%s1 + $0x8] sm:$0xf]
  %v55 = vld [vmem:[%s1 + $0xc] sm:$0xf]
  %v56 = vld [vmem:[%s2] sm:$0x1]
  %v58 = vlaneseq
  %v59 = vshrl.u32 %v58, 7
  %v60 = vsub.s32 0, %v59
  %v61 = vrot.slane %v56, %v60
  %v79 = vunpack.c.l.b16 %v36
  %v80 = vunpack.c.l.b16 %v37
  %v81 = vunpack.c.l.b16 %v38
  %v82 = vunpack.c.l.b16 %v39
  %v83 = vunpack.c.l.b16 %v40
  %v84 = vunpack.c.l.b16 %v41
  %v85 = vunpack.c.l.b16 %v42
  %v86 = vunpack.c.l.b16 %v43
  %v87 = vunpack.c.l.b16 %v44
  %v88 = vunpack.c.l.b16 %v45
  %v89 = vunpack.c.l.b16 %v46
  %v90 = vunpack.c.l.b16 %v47
  %v91 = vunpack.c.l.b16 %v48
  %v92 = vunpack.c.l.b16 %v49
  %v93 = vunpack.c.l.b16 %v50
  %v94 = vunpack.c.l.b16 %v51
  %v95 = vpack.c.b16 %v80, %v79
  %v96 = vpack.c.b16 %v82, %v81
  %v97 = vpack.c.b16 %v84, %v83
  %v98 = vpack.c.b16 %v86, %v85
  %v99 = vpack.c.b16 %v88, %v87
  %v100 = vpack.c.b16 %v90, %v89
  %v101 = vpack.c.b16 %v92, %v91
  %v102 = vpack.c.b16 %v94, %v93
  %v107 = vunpack.c.l.b16 %v52
  %v108 = vunpack.c.l.b16 %v53
  %v109 = vunpack.c.l.b16 %v54
  %v110 = vunpack.c.l.b16 %v55
  %v111 = vpack.c.b16 %v108, %v107
  %v112 = vpack.c.b16 %v110, %v109
  %vm115 = vcmask 261120
  %v117 = vsel %vm115, %v95, 0
  %v120 = vsel %vm115, %v96, 0
  %v123 = vsel %vm115, %v97, 0
  %v126 = vsel %vm115, %v98, 0
  %v129 = vsel %vm115, %v99, 0
  %v132 = vsel %vm115, %v100, 0
  %v135 = vsel %vm115, %v101, 0
  %v138 = vsel %vm115, %v102, 0
  %140 = vmatprep.subr.bf16.mxu0 0
  %141 = vmatpush1.bf16.msra.mxu0 0
  %142 = vmatprep.subr.bf16.mxu0 0
  %143 = vmatpush1.bf16.msra.mxu0 0
  %144 = vmatprep.subr.bf16.mxu0 0
  %145 = vmatpush1.bf16.msra.mxu0 0
  %146 = vmatprep.subr.bf16.mxu0 0
  %147 = vmatpush1.bf16.msra.mxu0 0
  %148 = vmatprep.subr.bf16.mxu0 0
  %149 = vmatpush1.bf16.msra.mxu0 0
  %150 = vmatprep.subr.bf16.mxu0 0
  %151 = vmatpush1.bf16.msra.mxu0 0
  %152 = vmatprep.subr.bf16.mxu0 0
  %153 = vmatpush1.bf16.msra.mxu0 %v112
  %154 = vmatprep.subr.bf16.mxu0 0
  %155 = vmatpush1.bf16.msra.mxu0 %v111
  %156 = vmatprep.subr.bf16.mxu0 0
  %157 = vmatpush2.bf16.msra.mxu0 0
  %158 = vmatprep.subr.bf16.mxu0 0
  %159 = vmatpush2.bf16.msra.mxu0 0
  %160 = vmatprep.subr.bf16.mxu0 0
  %161 = vmatpush2.bf16.msra.mxu0 0
  %162 = vmatprep.subr.bf16.mxu0 0
  %163 = vmatpush2.bf16.msra.mxu0 0
  %164 = vmatprep.subr.bf16.mxu0 0
  %165 = vmatpush2.bf16.msra.mxu0 0
  %166 = vmatprep.subr.bf16.mxu0 0
  %167 = vmatpush2.bf16.msra.mxu0 0
  %168 = vmatprep.subr.bf16.mxu0 0
  %169 = vmatpush2.bf16.msra.mxu0 0
  %170 = vmatprep.subr.bf16.mxu0 0
  %171 = vmatpush2.bf16.msra.mxu0 0
  %172 = vmatprep.mubr.bf16.mxu0 0
  %173 = vmatmul.mubr.bf16.gmra.mxu0 %v117
  %v174 = vpop.f32.mrf.mxu0
  %v175 = vadd.f32 %v61, %v174
  %v176 = vpop.f32.mrf.mxu0
  %v177 = vpop.f32.mrf.mxu0
  %v178 = vadd.f32 %v61, %v177
  %v179 = vpop.f32.mrf.mxu0
  %180 = vmatprep.mubr.bf16.mxu0 0
  %181 = vmatmul.mubr.bf16.gmra.mxu0 %v120
  %v182 = vpop.f32.mrf.mxu0
  %v183 = vadd.f32 %v61, %v182
  %v184 = vpop.f32.mrf.mxu0
  %v185 = vpop.f32.mrf.mxu0
  %v186 = vadd.f32 %v61, %v185
  %v187 = vpop.f32.mrf.mxu0
  %188 = vmatprep.mubr.bf16.mxu0 0
  %189 = vmatmul.mubr.bf16.gmra.mxu0 %v123
  %v190 = vpop.f32.mrf.mxu0
  %v191 = vadd.f32 %v61, %v190
  %v192 = vpop.f32.mrf.mxu0
  %v193 = vpop.f32.mrf.mxu0
  %v194 = vadd.f32 %v61, %v193
  %v195 = vpop.f32.mrf.mxu0
  %196 = vmatprep.mubr.bf16.mxu0 0
  %197 = vmatmul.mubr.bf16.gmra.mxu0 %v126
  %v198 = vpop.f32.mrf.mxu0
  %v199 = vadd.f32 %v61, %v198
  %v200 = vpop.f32.mrf.mxu0
  %v201 = vpop.f32.mrf.mxu0
  %v202 = vadd.f32 %v61, %v201
  %v203 = vpop.f32.mrf.mxu0
  %204 = vmatprep.mubr.bf16.mxu0 0
  %205 = vmatmul.mubr.bf16.gmra.mxu0 %v129
  %v206 = vpop.f32.mrf.mxu0
  %v207 = vadd.f32 %v61, %v206
  %v208 = vpop.f32.mrf.mxu0
  %v209 = vpop.f32.mrf.mxu0
  %v210 = vadd.f32 %v61, %v209
  %v211 = vpop.f32.mrf.mxu0
  %212 = vmatprep.mubr.bf16.mxu0 0
  %213 = vmatmul.mubr.bf16.gmra.mxu0 %v132
  %v214 = vpop.f32.mrf.mxu0
  %v215 = vadd.f32 %v61, %v214
  %v216 = vpop.f32.mrf.mxu0
  %v217 = vpop.f32.mrf.mxu0
  %v218 = vadd.f32 %v61, %v217
  %v219 = vpop.f32.mrf.mxu0
  %220 = vmatprep.mubr.bf16.mxu0 0
  %221 = vmatmul.mubr.bf16.gmra.mxu0 %v135
  %v222 = vpop.f32.mrf.mxu0
  %v223 = vadd.f32 %v61, %v222
  %v224 = vpop.f32.mrf.mxu0
  %v225 = vpop.f32.mrf.mxu0
  %v226 = vadd.f32 %v61, %v225
  %v227 = vpop.f32.mrf.mxu0
  %228 = vmatprep.mubr.bf16.mxu0 0
  %229 = vmatmul.mubr.bf16.gmra.mxu0 %v138
  %v230 = vpop.f32.mrf.mxu0
  %v231 = vadd.f32 %v61, %v230
  %v232 = vpop.f32.mrf.mxu0
  %v233 = vpop.f32.mrf.mxu0
  %v234 = vadd.f32 %v61, %v233
  %v235 = vpop.f32.mrf.mxu0
  %236 = vdwg.mxu0
  %v237 = vmax.f32 %v175, 0.0
  %v238 = vmax.f32 %v178, 0.0
  %v239 = vmax.f32 %v183, 0.0
  %v240 = vmax.f32 %v186, 0.0
  %v241 = vmax.f32 %v191, 0.0
  %v242 = vmax.f32 %v194, 0.0
  %v243 = vmax.f32 %v199, 0.0
  %v244 = vmax.f32 %v202, 0.0
  %v245 = vmax.f32 %v207, 0.0
  %v246 = vmax.f32 %v210, 0.0
  %v247 = vmax.f32 %v215, 0.0
  %v248 = vmax.f32 %v218, 0.0
  %v249 = vmax.f32 %v223, 0.0
  %v250 = vmax.f32 %v226, 0.0
  %v251 = vmax.f32 %v231, 0.0
  %v252 = vmax.f32 %v234, 0.0
  %vm253 = vcmask 130048
  %254 = vst.msk [vmem:[#allocation2] sm:$0xff] %vm253, 0.0
  %vm255 = vcmask 123904
  %256 = vst.msk [vmem:[#allocation2 + $0x8] sm:$0x3] %vm255, 0.0
  %257 = vst.msk [vmem:[#allocation2 + $0xa0] sm:$0xff] %vm253, 0.0
  %258 = vst.msk [vmem:[#allocation2 + $0xa8] sm:$0x3] %vm255, 0.0
  %s259 = scalar_lea.vmem [#allocation2], 144
  %260 = vst.msk [vmem:[%s259] sm:$0xff] %vm253, 0.0
  %261 = vst.msk [vmem:[%s259 + $0x8] sm:$0x3] %vm255, 0.0
  %262 = vst.msk [vmem:[%s259 + $0xa0] sm:$0xff] %vm253, 0.0
  %263 = vst.msk [vmem:[%s259 + $0xa8] sm:$0x3] %vm255, 0.0
  %vm264 = vcmask 122880
  %265 = vst.msk [vmem:[#allocation2] sm:$0x1] %vm264, 0.0
  %266 = vst.msk [vmem:[#allocation2 + $0x10] sm:$0x1] %vm264, 0.0
  %267 = vst.msk [vmem:[#allocation2 + $0x20] sm:$0x1] %vm264, 0.0
  %268 = vst.msk [vmem:[#allocation2 + $0x30] sm:$0x1] %vm264, 0.0
  %269 = vst.msk [vmem:[#allocation2 + $0x40] sm:$0x1] %vm264, 0.0
  %270 = vst.msk [vmem:[#allocation2 + $0x50] sm:$0x1] %vm264, 0.0
  %271 = vst.msk [vmem:[#allocation2 + $0x60] sm:$0x1] %vm264, 0.0
  %272 = vst.msk [vmem:[#allocation2 + $0x70] sm:$0x1] %vm264, 0.0
  %273 = vst.msk [vmem:[#allocation2 + $0x80] sm:$0x1] %vm264, 0.0
  %274 = vst.msk [vmem:[#allocation2 + $0x90] sm:$0x1] %vm264, 0.0
  %275 = vst.msk [vmem:[#allocation2 + $0xa0] sm:$0x1] %vm264, 0.0
  %276 = vst.msk [vmem:[#allocation2 + $0xb0] sm:$0x1] %vm264, 0.0
  %277 = vst.msk [vmem:[#allocation2 + $0xc0] sm:$0x1] %vm264, 0.0
  %278 = vst.msk [vmem:[#allocation2 + $0xd0] sm:$0x1] %vm264, 0.0
  %279 = vst.msk [vmem:[#allocation2 + $0xe0] sm:$0x1] %vm264, 0.0
  %280 = vst.msk [vmem:[#allocation2 + $0xf0] sm:$0x1] %vm264, 0.0
  %281 = vst.msk [vmem:[#allocation2 + $0x100] sm:$0x1] %vm264, 0.0
  %282 = vst.msk [vmem:[#allocation2 + $0x110] sm:$0x1] %vm264, 0.0
  %283 = vst.msk [vmem:[#allocation2 + $0x120] sm:$0x1] %vm264, 0.0
  %284 = vst.msk [vmem:[#allocation2 + $0x130] sm:$0x1] %vm264, 0.0
  %285 = vst.msk [vmem:[#allocation2 + $0x9] sm:$0x1] %vm264, 0.0
  %286 = vst.msk [vmem:[#allocation2 + $0x19] sm:$0x1] %vm264, 0.0
  %287 = vst.msk [vmem:[#allocation2 + $0x29] sm:$0x1] %vm264, 0.0
  %288 = vst.msk [vmem:[#allocation2 + $0x39] sm:$0x1] %vm264, 0.0
  %289 = vst.msk [vmem:[#allocation2 + $0x49] sm:$0x1] %vm264, 0.0
  %290 = vst.msk [vmem:[#allocation2 + $0x59] sm:$0x1] %vm264, 0.0
  %291 = vst.msk [vmem:[#allocation2 + $0x69] sm:$0x1] %vm264, 0.0
  %292 = vst.msk [vmem:[#allocation2 + $0x79] sm:$0x1] %vm264, 0.0
  %293 = vst.msk [vmem:[#allocation2 + $0x89] sm:$0x1] %vm264, 0.0
  %294 = vst.msk [vmem:[#allocation2 + $0x99] sm:$0x1] %vm264, 0.0
  %295 = vst.msk [vmem:[#allocation2 + $0xa9] sm:$0x1] %vm264, 0.0
  %296 = vst.msk [vmem:[#allocation2 + $0xb9] sm:$0x1] %vm264, 0.0
  %297 = vst.msk [vmem:[#allocation2 + $0xc9] sm:$0x1] %vm264, 0.0
  %298 = vst.msk [vmem:[#allocation2 + $0xd9] sm:$0x1] %vm264, 0.0
  %299 = vst.msk [vmem:[#allocation2 + $0xe9] sm:$0x1] %vm264, 0.0
  %300 = vst.msk [vmem:[#allocation2 + $0xf9] sm:$0x1] %vm264, 0.0
  %301 = vst.msk [vmem:[#allocation2 + $0x109] sm:$0x1] %vm264, 0.0
  %302 = vst.msk [vmem:[#allocation2 + $0x119] sm:$0x1] %vm264, 0.0
  %303 = vst.msk [vmem:[#allocation2 + $0x129] sm:$0x1] %vm264, 0.0
  %304 = vst.msk [vmem:[#allocation2 + $0x139] sm:$0x1] %vm264, 0.0
  %s305 = scalar_lea.vmem [#allocation2], 16
  %306 = vst.msk [vmem:[%s305 + $0x1] sm:$0xff] %vm253, %v237
  %307 = vst.msk [vmem:[%s305 + $0x11] sm:$0xff] %vm253, %v238
  %308 = vst.msk [vmem:[%s305 + $0x21] sm:$0xff] %vm253, %v239
  %309 = vst.msk [vmem:[%s305 + $0x31] sm:$0xff] %vm253, %v240
  %310 = vst.msk [vmem:[%s305 + $0x41] sm:$0xff] %vm253, %v241
  %311 = vst.msk [vmem:[%s305 + $0x51] sm:$0xff] %vm253, %v242
  %312 = vst.msk [vmem:[%s305 + $0x61] sm:$0xff] %vm253, %v243
  %313 = vst.msk [vmem:[%s305 + $0x71] sm:$0xff] %vm253, %v244
  %314 = vst.msk [vmem:[%s305 + $0xa1] sm:$0xff] %vm253, %v245
  %315 = vst.msk [vmem:[%s305 + $0xb1] sm:$0xff] %vm253, %v246
  %316 = vst.msk [vmem:[%s305 + $0xc1] sm:$0xff] %vm253, %v247
  %317 = vst.msk [vmem:[%s305 + $0xd1] sm:$0xff] %vm253, %v248
  %318 = vst.msk [vmem:[%s305 + $0xe1] sm:$0xff] %vm253, %v249
  %319 = vst.msk [vmem:[%s305 + $0xf1] sm:$0xff] %vm253, %v250
  %320 = vst.msk [vmem:[%s305 + $0x101] sm:$0xff] %vm253, %v251
  %321 = vst.msk [vmem:[%s305 + $0x111] sm:$0xff] %vm253, %v252
  %v322 = vld [vmem:[#allocation2] sm:$0xff]
  %v323 = vld [vmem:[#allocation2 + $0x10] sm:$0xff]
  %v324 = vld [vmem:[#allocation2 + $0x20] sm:$0xff]
  %v325 = vld [vmem:[#allocation2 + $0x30] sm:$0xff]
  %v326 = vld [vmem:[#allocation2 + $0x40] sm:$0xff]
  %v327 = vld [vmem:[#allocation2 + $0x50] sm:$0xff]
  %v328 = vld [vmem:[#allocation2 + $0x60] sm:$0xff]
  %v329 = vld [vmem:[#allocation2 + $0x70] sm:$0xff]
  %v330 = vld [vmem:[#allocation2 + $0xa0] sm:$0xff]
  %v331 = vld [vmem:[#allocation2 + $0xb0] sm:$0xff]
  %v332 = vld [vmem:[#allocation2 + $0xc0] sm:$0xff]
  %v333 = vld [vmem:[#allocation2 + $0xd0] sm:$0xff]
  %v334 = vld [vmem:[#allocation2 + $0xe0] sm:$0xff]
  %v335 = vld [vmem:[#allocation2 + $0xf0] sm:$0xff]
  %v336 = vld [vmem:[#allocation2 + $0x100] sm:$0xff]
  %v337 = vld [vmem:[#allocation2 + $0x110] sm:$0xff]
  %v338 = vld [vmem:[#allocation2 + $0x1] sm:$0xff]
  %v339 = vld [vmem:[#allocation2 + $0x11] sm:$0xff]
  %v340 = vld [vmem:[#allocation2 + $0x21] sm:$0xff]
  %v341 = vld [vmem:[#allocation2 + $0x31] sm:$0xff]
  %v342 = vld [vmem:[#allocation2 + $0x41] sm:$0xff]
  %v343 = vld [vmem:[#allocation2 + $0x51] sm:$0xff]
  %v344 = vld [vmem:[#allocation2 + $0x61] sm:$0xff]
  %v345 = vld [vmem:[#allocation2 + $0x71] sm:$0xff]
  %v346 = vld [vmem:[#allocation2 + $0xa1] sm:$0xff]
  %v347 = vld [vmem:[#allocation2 + $0xb1] sm:$0xff]
  %v348 = vld [vmem:[#allocation2 + $0xc1] sm:$0xff]
  %v349 = vld [vmem:[#allocation2 + $0xd1] sm:$0xff]
  %v350 = vld [vmem:[#allocation2 + $0xe1] sm:$0xff]
  %v351 = vld [vmem:[#allocation2 + $0xf1] sm:$0xff]
  %v352 = vld [vmem:[#allocation2 + $0x101] sm:$0xff]
  %v353 = vld [vmem:[#allocation2 + $0x111] sm:$0xff]
  %v354 = vld [vmem:[#allocation2 + $0x2] sm:$0xff]
  %v355 = vld [vmem:[#allocation2 + $0x12] sm:$0xff]
  %v356 = vld [vmem:[#allocation2 + $0x22] sm:$0xff]
  %v357 = vld [vmem:[#allocation2 + $0x32] sm:$0xff]
  %v358 = vld [vmem:[#allocation2 + $0x42] sm:$0xff]
  %v359 = vld [vmem:[#allocation2 + $0x52] sm:$0xff]
  %v360 = vld [vmem:[#allocation2 + $0x62] sm:$0xff]
  %v361 = vld [vmem:[#allocation2 + $0x72] sm:$0xff]
  %v362 = vld [vmem:[#allocation2 + $0xa2] sm:$0xff]
  %v363 = vld [vmem:[#allocation2 + $0xb2] sm:$0xff]
  %v364 = vld [vmem:[#allocation2 + $0xc2] sm:$0xff]
  %v365 = vld [vmem:[#allocation2 + $0xd2] sm:$0xff]
  %v366 = vld [vmem:[#allocation2 + $0xe2] sm:$0xff]
  %v367 = vld [vmem:[#allocation2 + $0xf2] sm:$0xff]
  %v368 = vld [vmem:[#allocation2 + $0x102] sm:$0xff]
  %v369 = vld [vmem:[#allocation2 + $0x112] sm:$0xff]
  %v370 = vld [vmem:[%s305] sm:$0xff]
  %v371 = vld [vmem:[%s305 + $0x10] sm:$0xff]
  %v372 = vld [vmem:[%s305 + $0x20] sm:$0xff]
  %v373 = vld [vmem:[%s305 + $0x30] sm:$0xff]
  %v374 = vld [vmem:[%s305 + $0x40] sm:$0xff]
  %v375 = vld [vmem:[%s305 + $0x50] sm:$0xff]
  %v376 = vld [vmem:[%s305 + $0x60] sm:$0xff]
  %v377 = vld [vmem:[%s305 + $0x70] sm:$0xff]
  %v378 = vld [vmem:[%s305 + $0xa0] sm:$0xff]
  %v379 = vld [vmem:[%s305 + $0xb0] sm:$0xff]
  %v380 = vld [vmem:[%s305 + $0xc0] sm:$0xff]
  %v381 = vld [vmem:[%s305 + $0xd0] sm:$0xff]
  %v382 = vld [vmem:[%s305 + $0xe0] sm:$0xff]
  %v383 = vld [vmem:[%s305 + $0xf0] sm:$0xff]
  %v384 = vld [vmem:[%s305 + $0x100] sm:$0xff]
  %v385 = vld [vmem:[%s305 + $0x110] sm:$0xff]
  %v386 = vld [vmem:[%s305 + $0x1] sm:$0xff]
  %v387 = vld [vmem:[%s305 + $0x11] sm:$0xff]
  %v388 = vld [vmem:[%s305 + $0x21] sm:$0xff]
  %v389 = vld [vmem:[%s305 + $0x31] sm:$0xff]
  %v390 = vld [vmem:[%s305 + $0x41] sm:$0xff]
  %v391 = vld [vmem:[%s305 + $0x51] sm:$0xff]
  %v392 = vld [vmem:[%s305 + $0x61] sm:$0xff]
  %v393 = vld [vmem:[%s305 + $0x71] sm:$0xff]
  %v394 = vld [vmem:[%s305 + $0xa1] sm:$0xff]
  %v395 = vld [vmem:[%s305 + $0xb1] sm:$0xff]
  %v396 = vld [vmem:[%s305 + $0xc1] sm:$0xff]
  %v397 = vld [vmem:[%s305 + $0xd1] sm:$0xff]
  %v398 = vld [vmem:[%s305 + $0xe1] sm:$0xff]
  %v399 = vld [vmem:[%s305 + $0xf1] sm:$0xff]
  %v400 = vld [vmem:[%s305 + $0x101] sm:$0xff]
  %v401 = vld [vmem:[%s305 + $0x111] sm:$0xff]
  %v402 = vld [vmem:[%s305 + $0x2] sm:$0xff]
  %v403 = vld [vmem:[%s305 + $0x12] sm:$0xff]
  %v404 = vld [vmem:[%s305 + $0x22] sm:$0xff]
  %v405 = vld [vmem:[%s305 + $0x32] sm:$0xff]
  %v406 = vld [vmem:[%s305 + $0x42] sm:$0xff]
  %v407 = vld [vmem:[%s305 + $0x52] sm:$0xff]
  %v408 = vld [vmem:[%s305 + $0x62] sm:$0xff]
  %v409 = vld [vmem:[%s305 + $0x72] sm:$0xff]
  %v410 = vld [vmem:[%s305 + $0xa2] sm:$0xff]
  %v411 = vld [vmem:[%s305 + $0xb2] sm:$0xff]
  %v412 = vld [vmem:[%s305 + $0xc2] sm:$0xff]
  %v413 = vld [vmem:[%s305 + $0xd2] sm:$0xff]
  %v414 = vld [vmem:[%s305 + $0xe2] sm:$0xff]
  %v415 = vld [vmem:[%s305 + $0xf2] sm:$0xff]
  %v416 = vld [vmem:[%s305 + $0x102] sm:$0xff]
  %v417 = vld [vmem:[%s305 + $0x112] sm:$0xff]
  %s418 = scalar_lea.vmem [#allocation2], 32
  %v419 = vld [vmem:[%s418] sm:$0xff]
  %v420 = vld [vmem:[%s418 + $0x10] sm:$0xff]
  %v421 = vld [vmem:[%s418 + $0x20] sm:$0xff]
  %v422 = vld [vmem:[%s418 + $0x30] sm:$0xff]
  %v423 = vld [vmem:[%s418 + $0x40] sm:$0xff]
  %v424 = vld [vmem:[%s418 + $0x50] sm:$0xff]
  %v425 = vld [vmem:[%s418 + $0x60] sm:$0xff]
  %v426 = vld [vmem:[%s418 + $0x70] sm:$0xff]
  %v427 = vld [vmem:[%s418 + $0xa0] sm:$0xff]
  %v428 = vld [vmem:[%s418 + $0xb0] sm:$0xff]
  %v429 = vld [vmem:[%s418 + $0xc0] sm:$0xff]
  %v430 = vld [vmem:[%s418 + $0xd0] sm:$0xff]
  %v431 = vld [vmem:[%s418 + $0xe0] sm:$0xff]
  %v432 = vld [vmem:[%s418 + $0xf0] sm:$0xff]
  %v433 = vld [vmem:[%s418 + $0x100] sm:$0xff]
  %v434 = vld [vmem:[%s418 + $0x110] sm:$0xff]
  %v435 = vld [vmem:[%s418 + $0x1] sm:$0xff]
  %v436 = vld [vmem:[%s418 + $0x11] sm:$0xff]
  %v437 = vld [vmem:[%s418 + $0x21] sm:$0xff]
  %v438 = vld [vmem:[%s418 + $0x31] sm:$0xff]
  %v439 = vld [vmem:[%s418 + $0x41] sm:$0xff]
  %v440 = vld [vmem:[%s418 + $0x51] sm:$0xff]
  %v441 = vld [vmem:[%s418 + $0x61] sm:$0xff]
  %v442 = vld [vmem:[%s418 + $0x71] sm:$0xff]
  %v443 = vld [vmem:[%s418 + $0xa1] sm:$0xff]
  %v444 = vld [vmem:[%s418 + $0xb1] sm:$0xff]
  %v445 = vld [vmem:[%s418 + $0xc1] sm:$0xff]
  %v446 = vld [vmem:[%s418 + $0xd1] sm:$0xff]
  %v447 = vld [vmem:[%s418 + $0xe1] sm:$0xff]
  %v448 = vld [vmem:[%s418 + $0xf1] sm:$0xff]
  %v449 = vld [vmem:[%s418 + $0x101] sm:$0xff]
  %v450 = vld [vmem:[%s418 + $0x111] sm:$0xff]
  %v451 = vld [vmem:[%s418 + $0x2] sm:$0xff]
  %v452 = vld [vmem:[%s418 + $0x12] sm:$0xff]
  %v453 = vld [vmem:[%s418 + $0x22] sm:$0xff]
  %v454 = vld [vmem:[%s418 + $0x32] sm:$0xff]
  %v455 = vld [vmem:[%s418 + $0x42] sm:$0xff]
  %v456 = vld [vmem:[%s418 + $0x52] sm:$0xff]
  %v457 = vld [vmem:[%s418 + $0x62] sm:$0xff]
  %v458 = vld [vmem:[%s418 + $0x72] sm:$0xff]
  %v459 = vld [vmem:[%s418 + $0xa2] sm:$0xff]
  %v460 = vld [vmem:[%s418 + $0xb2] sm:$0xff]
  %v461 = vld [vmem:[%s418 + $0xc2] sm:$0xff]
  %v462 = vld [vmem:[%s418 + $0xd2] sm:$0xff]
  %v463 = vld [vmem:[%s418 + $0xe2] sm:$0xff]
  %v464 = vld [vmem:[%s418 + $0xf2] sm:$0xff]
  %v465 = vld [vmem:[%s418 + $0x102] sm:$0xff]
  %v466 = vld [vmem:[%s418 + $0x112] sm:$0xff]
  %483 = vrot.lane.b32.xlu0 %v338, 16
  %v484 = vpop.permute.xlu0 %483
  %485 = vrot.lane.b32.xlu0 %v339, 16
  %v486 = vpop.permute.xlu0 %485
  %487 = vrot.lane.b32.xlu0 %v340, 16
  %v488 = vpop.permute.xlu0 %487
  %489 = vrot.lane.b32.xlu0 %v341, 16
  %v490 = vpop.permute.xlu0 %489
  %491 = vrot.lane.b32.xlu0 %v342, 16
  %v492 = vpop.permute.xlu0 %491
  %493 = vrot.lane.b32.xlu0 %v343, 16
  %v494 = vpop.permute.xlu0 %493
  %495 = vrot.lane.b32.xlu0 %v344, 16
  %v496 = vpop.permute.xlu0 %495
  %497 = vrot.lane.b32.xlu0 %v345, 16
  %v498 = vpop.permute.xlu0 %497
  %499 = vrot.lane.b32.xlu0 %v346, 16
  %v500 = vpop.permute.xlu0 %499
  %501 = vrot.lane.b32.xlu0 %v347, 16
  %v502 = vpop.permute.xlu0 %501
  %503 = vrot.lane.b32.xlu0 %v348, 16
  %v504 = vpop.permute.xlu0 %503
  %505 = vrot.lane.b32.xlu0 %v349, 16
  %v506 = vpop.permute.xlu0 %505
  %507 = vrot.lane.b32.xlu0 %v350, 16
  %v508 = vpop.permute.xlu0 %507
  %509 = vrot.lane.b32.xlu0 %v351, 16
  %v510 = vpop.permute.xlu0 %509
  %511 = vrot.lane.b32.xlu0 %v352, 16
  %v512 = vpop.permute.xlu0 %511
  %513 = vrot.lane.b32.xlu0 %v353, 16
  %v514 = vpop.permute.xlu0 %513
  %547 = vrot.lane.b32.xlu0 %v354, 32
  %v548 = vpop.permute.xlu0 %547
  %549 = vrot.lane.b32.xlu0 %v355, 32
  %v550 = vpop.permute.xlu0 %549
  %551 = vrot.lane.b32.xlu0 %v356, 32
  %v552 = vpop.permute.xlu0 %551
  %553 = vrot.lane.b32.xlu0 %v357, 32
  %v554 = vpop.permute.xlu0 %553
  %555 = vrot.lane.b32.xlu0 %v358, 32
  %v556 = vpop.permute.xlu0 %555
  %557 = vrot.lane.b32.xlu0 %v359, 32
  %v558 = vpop.permute.xlu0 %557
  %559 = vrot.lane.b32.xlu0 %v360, 32
  %v560 = vpop.permute.xlu0 %559
  %561 = vrot.lane.b32.xlu0 %v361, 32
  %v562 = vpop.permute.xlu0 %561
  %563 = vrot.lane.b32.xlu0 %v362, 32
  %v564 = vpop.permute.xlu0 %563
  %565 = vrot.lane.b32.xlu0 %v363, 32
  %v566 = vpop.permute.xlu0 %565
  %567 = vrot.lane.b32.xlu0 %v364, 32
  %v568 = vpop.permute.xlu0 %567
  %569 = vrot.lane.b32.xlu0 %v365, 32
  %v570 = vpop.permute.xlu0 %569
  %571 = vrot.lane.b32.xlu0 %v366, 32
  %v572 = vpop.permute.xlu0 %571
  %573 = vrot.lane.b32.xlu0 %v367, 32
  %v574 = vpop.permute.xlu0 %573
  %575 = vrot.lane.b32.xlu0 %v368, 32
  %v576 = vpop.permute.xlu0 %575
  %577 = vrot.lane.b32.xlu0 %v369, 32
  %v578 = vpop.permute.xlu0 %577
  %611 = vrot.lane.b32.xlu0 %v370, 48
  %v612 = vpop.permute.xlu0 %611
  %613 = vrot.lane.b32.xlu0 %v371, 48
  %v614 = vpop.permute.xlu0 %613
  %615 = vrot.lane.b32.xlu0 %v372, 48
  %v616 = vpop.permute.xlu0 %615
  %617 = vrot.lane.b32.xlu0 %v373, 48
  %v618 = vpop.permute.xlu0 %617
  %619 = vrot.lane.b32.xlu0 %v374, 48
  %v620 = vpop.permute.xlu0 %619
  %621 = vrot.lane.b32.xlu0 %v375, 48
  %v622 = vpop.permute.xlu0 %621
  %623 = vrot.lane.b32.xlu0 %v376, 48
  %v624 = vpop.permute.xlu0 %623
  %625 = vrot.lane.b32.xlu0 %v377, 48
  %v626 = vpop.permute.xlu0 %625
  %627 = vrot.lane.b32.xlu0 %v378, 48
  %v628 = vpop.permute.xlu0 %627
  %629 = vrot.lane.b32.xlu0 %v379, 48
  %v630 = vpop.permute.xlu0 %629
  %631 = vrot.lane.b32.xlu0 %v380, 48
  %v632 = vpop.permute.xlu0 %631
  %633 = vrot.lane.b32.xlu0 %v381, 48
  %v634 = vpop.permute.xlu0 %633
  %635 = vrot.lane.b32.xlu0 %v382, 48
  %v636 = vpop.permute.xlu0 %635
  %637 = vrot.lane.b32.xlu0 %v383, 48
  %v638 = vpop.permute.xlu0 %637
  %639 = vrot.lane.b32.xlu0 %v384, 48
  %v640 = vpop.permute.xlu0 %639
  %641 = vrot.lane.b32.xlu0 %v385, 48
  %v642 = vpop.permute.xlu0 %641
  %675 = vrot.lane.b32.xlu0 %v386, 64
  %v676 = vpop.permute.xlu0 %675
  %677 = vrot.lane.b32.xlu0 %v387, 64
  %v678 = vpop.permute.xlu0 %677
  %679 = vrot.lane.b32.xlu0 %v388, 64
  %v680 = vpop.permute.xlu0 %679
  %681 = vrot.lane.b32.xlu0 %v389, 64
  %v682 = vpop.permute.xlu0 %681
  %683 = vrot.lane.b32.xlu0 %v390, 64
  %v684 = vpop.permute.xlu0 %683
  %685 = vrot.lane.b32.xlu0 %v391, 64
  %v686 = vpop.permute.xlu0 %685
  %687 = vrot.lane.b32.xlu0 %v392, 64
  %v688 = vpop.permute.xlu0 %687
  %689 = vrot.lane.b32.xlu0 %v393, 64
  %v690 = vpop.permute.xlu0 %689
  %691 = vrot.lane.b32.xlu0 %v394, 64
  %v692 = vpop.permute.xlu0 %691
  %693 = vrot.lane.b32.xlu0 %v395, 64
  %v694 = vpop.permute.xlu0 %693
  %695 = vrot.lane.b32.xlu0 %v396, 64
  %v696 = vpop.permute.xlu0 %695
  %697 = vrot.lane.b32.xlu0 %v397, 64
  %v698 = vpop.permute.xlu0 %697
  %699 = vrot.lane.b32.xlu0 %v398, 64
  %v700 = vpop.permute.xlu0 %699
  %701 = vrot.lane.b32.xlu0 %v399, 64
  %v702 = vpop.permute.xlu0 %701
  %703 = vrot.lane.b32.xlu0 %v400, 64
  %v704 = vpop.permute.xlu0 %703
  %705 = vrot.lane.b32.xlu0 %v401, 64
  %v706 = vpop.permute.xlu0 %705
  %739 = vrot.lane.b32.xlu0 %v402, 80
  %v740 = vpop.permute.xlu0 %739
  %741 = vrot.lane.b32.xlu0 %v403, 80
  %v742 = vpop.permute.xlu0 %741
  %743 = vrot.lane.b32.xlu0 %v404, 80
  %v744 = vpop.permute.xlu0 %743
  %745 = vrot.lane.b32.xlu0 %v405, 80
  %v746 = vpop.permute.xlu0 %745
  %747 = vrot.lane.b32.xlu0 %v406, 80
  %v748 = vpop.permute.xlu0 %747
  %749 = vrot.lane.b32.xlu0 %v407, 80
  %v750 = vpop.permute.xlu0 %749
  %751 = vrot.lane.b32.xlu0 %v408, 80
  %v752 = vpop.permute.xlu0 %751
  %753 = vrot.lane.b32.xlu0 %v409, 80
  %v754 = vpop.permute.xlu0 %753
  %755 = vrot.lane.b32.xlu0 %v410, 80
  %v756 = vpop.permute.xlu0 %755
  %757 = vrot.lane.b32.xlu0 %v411, 80
  %v758 = vpop.permute.xlu0 %757
  %759 = vrot.lane.b32.xlu0 %v412, 80
  %v760 = vpop.permute.xlu0 %759
  %761 = vrot.lane.b32.xlu0 %v413, 80
  %v762 = vpop.permute.xlu0 %761
  %763 = vrot.lane.b32.xlu0 %v414, 80
  %v764 = vpop.permute.xlu0 %763
  %765 = vrot.lane.b32.xlu0 %v415, 80
  %v766 = vpop.permute.xlu0 %765
  %767 = vrot.lane.b32.xlu0 %v416, 80
  %v768 = vpop.permute.xlu0 %767
  %769 = vrot.lane.b32.xlu0 %v417, 80
  %v770 = vpop.permute.xlu0 %769
  %803 = vrot.lane.b32.xlu0 %v419, 96
  %v804 = vpop.permute.xlu0 %803
  %805 = vrot.lane.b32.xlu0 %v420, 96
  %v806 = vpop.permute.xlu0 %805
  %807 = vrot.lane.b32.xlu0 %v421, 96
  %v808 = vpop.permute.xlu0 %807
  %809 = vrot.lane.b32.xlu0 %v422, 96
  %v810 = vpop.permute.xlu0 %809
  %811 = vrot.lane.b32.xlu0 %v423, 96
  %v812 = vpop.permute.xlu0 %811
  %813 = vrot.lane.b32.xlu0 %v424, 96
  %v814 = vpop.permute.xlu0 %813
  %815 = vrot.lane.b32.xlu0 %v425, 96
  %v816 = vpop.permute.xlu0 %815
  %817 = vrot.lane.b32.xlu0 %v426, 96
  %v818 = vpop.permute.xlu0 %817
  %819 = vrot.lane.b32.xlu0 %v427, 96
  %v820 = vpop.permute.xlu0 %819
  %821 = vrot.lane.b32.xlu0 %v428, 96
  %v822 = vpop.permute.xlu0 %821
  %823 = vrot.lane.b32.xlu0 %v429, 96
  %v824 = vpop.permute.xlu0 %823
  %825 = vrot.lane.b32.xlu0 %v430, 96
  %v826 = vpop.permute.xlu0 %825
  %827 = vrot.lane.b32.xlu0 %v431, 96
  %v828 = vpop.permute.xlu0 %827
  %829 = vrot.lane.b32.xlu0 %v432, 96
  %v830 = vpop.permute.xlu0 %829
  %831 = vrot.lane.b32.xlu0 %v433, 96
  %v832 = vpop.permute.xlu0 %831
  %833 = vrot.lane.b32.xlu0 %v434, 96
  %v834 = vpop.permute.xlu0 %833
  %867 = vrot.lane.b32.xlu0 %v435, 112
  %v868 = vpop.permute.xlu0 %867
  %869 = vrot.lane.b32.xlu0 %v436, 112
  %v870 = vpop.permute.xlu0 %869
  %871 = vrot.lane.b32.xlu0 %v437, 112
  %v872 = vpop.permute.xlu0 %871
  %873 = vrot.lane.b32.xlu0 %v438, 112
  %v874 = vpop.permute.xlu0 %873
  %875 = vrot.lane.b32.xlu0 %v439, 112
  %v876 = vpop.permute.xlu0 %875
  %877 = vrot.lane.b32.xlu0 %v440, 112
  %v878 = vpop.permute.xlu0 %877
  %879 = vrot.lane.b32.xlu0 %v441, 112
  %v880 = vpop.permute.xlu0 %879
  %881 = vrot.lane.b32.xlu0 %v442, 112
  %v882 = vpop.permute.xlu0 %881
  %883 = vrot.lane.b32.xlu0 %v443, 112
  %v884 = vpop.permute.xlu0 %883
  %885 = vrot.lane.b32.xlu0 %v444, 112
  %v886 = vpop.permute.xlu0 %885
  %887 = vrot.lane.b32.xlu0 %v445, 112
  %v888 = vpop.permute.xlu0 %887
  %889 = vrot.lane.b32.xlu0 %v446, 112
  %v890 = vpop.permute.xlu0 %889
  %891 = vrot.lane.b32.xlu0 %v447, 112
  %v892 = vpop.permute.xlu0 %891
  %893 = vrot.lane.b32.xlu0 %v448, 112
  %v894 = vpop.permute.xlu0 %893
  %895 = vrot.lane.b32.xlu0 %v449, 112
  %v896 = vpop.permute.xlu0 %895
  %897 = vrot.lane.b32.xlu0 %v450, 112
  %v898 = vpop.permute.xlu0 %897
  %v915 = vsel %vm253, %v322, %v484
  %v916 = vsel %vm253, %v323, %v486
  %v917 = vsel %vm253, %v324, %v488
  %v918 = vsel %vm253, %v325, %v490
  %v919 = vsel %vm253, %v326, %v492
  %v920 = vsel %vm253, %v327, %v494
  %v921 = vsel %vm253, %v328, %v496
  %v922 = vsel %vm253, %v329, %v498
  %v923 = vsel %vm253, %v330, %v500
  %v924 = vsel %vm253, %v331, %v502
  %v925 = vsel %vm253, %v332, %v504
  %v926 = vsel %vm253, %v333, %v506
  %v927 = vsel %vm253, %v334, %v508
  %v928 = vsel %vm253, %v335, %v510
  %v929 = vsel %vm253, %v336, %v512
  %v930 = vsel %vm253, %v337, %v514
  %v931 = vsel %vm115, %v915, %v548
  %v932 = vsel %vm115, %v916, %v550
  %v933 = vsel %vm115, %v917, %v552
  %v934 = vsel %vm115, %v918, %v554
  %v935 = vsel %vm115, %v919, %v556
  %v936 = vsel %vm115, %v920, %v558
  %v937 = vsel %vm115, %v921, %v560
  %v938 = vsel %vm115, %v922, %v562
  %v939 = vsel %vm115, %v923, %v564
  %v940 = vsel %vm115, %v924, %v566
  %v941 = vsel %vm115, %v925, %v568
  %v942 = vsel %vm115, %v926, %v570
  %v943 = vsel %vm115, %v927, %v572
  %v944 = vsel %vm115, %v928, %v574
  %v945 = vsel %vm115, %v929, %v576
  %v946 = vsel %vm115, %v930, %v578
  %vm947 = vcmask 392192
  %v948 = vsel %vm947, %v931, %v612
  %v949 = vsel %vm947, %v932, %v614
  %v950 = vsel %vm947, %v933, %v616
  %v951 = vsel %vm947, %v934, %v618
  %v952 = vsel %vm947, %v935, %v620
  %v953 = vsel %vm947, %v936, %v622
  %v954 = vsel %vm947, %v937, %v624
  %v955 = vsel %vm947, %v938, %v626
  %v956 = vsel %vm947, %v939, %v628
  %v957 = vsel %vm947, %v940, %v630
  %v958 = vsel %vm947, %v941, %v632
  %v959 = vsel %vm947, %v942, %v634
  %v960 = vsel %vm947, %v943, %v636
  %v961 = vsel %vm947, %v944, %v638
  %v962 = vsel %vm947, %v945, %v640
  %v963 = vsel %vm947, %v946, %v642
  %vm964 = vcmask 523264
  %v965 = vsel %vm964, %v948, %v676
  %v966 = vsel %vm964, %v949, %v678
  %v967 = vsel %vm964, %v950, %v680
  %v968 = vsel %vm964, %v951, %v682
  %v969 = vsel %vm964, %v952, %v684
  %v970 = vsel %vm964, %v953, %v686
  %v971 = vsel %vm964, %v954, %v688
  %v972 = vsel %vm964, %v955, %v690
  %v973 = vsel %vm964, %v956, %v692
  %v974 = vsel %vm964, %v957, %v694
  %v975 = vsel %vm964, %v958, %v696
  %v976 = vsel %vm964, %v959, %v698
  %v977 = vsel %vm964, %v960, %v700
  %v978 = vsel %vm964, %v961, %v702
  %v979 = vsel %vm964, %v962, %v704
  %v980 = vsel %vm964, %v963, %v706
  %vm981 = vcmask 654336
  %v982 = vsel %vm981, %v965, %v740
  %v983 = vsel %vm981, %v966, %v742
  %v984 = vsel %vm981, %v967, %v744
  %v985 = vsel %vm981, %v968, %v746
  %v986 = vsel %vm981, %v969, %v748
  %v987 = vsel %vm981, %v970, %v750
  %v988 = vsel %vm981, %v971, %v752
  %v989 = vsel %vm981, %v972, %v754
  %v990 = vsel %vm981, %v973, %v756
  %v991 = vsel %vm981, %v974, %v758
  %v992 = vsel %vm981, %v975, %v760
  %v993 = vsel %vm981, %v976, %v762
  %v994 = vsel %vm981, %v977, %v764
  %v995 = vsel %vm981, %v978, %v766
  %v996 = vsel %vm981, %v979, %v768
  %v997 = vsel %vm981, %v980, %v770
  %vm998 = vcmask 785408
  %v999 = vsel %vm998, %v982, %v804
  %v1000 = vsel %vm998, %v983, %v806
  %v1001 = vsel %vm998, %v984, %v808
  %v1002 = vsel %vm998, %v985, %v810
  %v1003 = vsel %vm998, %v986, %v812
  %v1004 = vsel %vm998, %v987, %v814
  %v1005 = vsel %vm998, %v988, %v816
  %v1006 = vsel %vm998, %v989, %v818
  %v1007 = vsel %vm998, %v990, %v820
  %v1008 = vsel %vm998, %v991, %v822
  %v1009 = vsel %vm998, %v992, %v824
  %v1010 = vsel %vm998, %v993, %v826
  %v1011 = vsel %vm998, %v994, %v828
  %v1012 = vsel %vm998, %v995, %v830
  %v1013 = vsel %vm998, %v996, %v832
  %v1014 = vsel %vm998, %v997, %v834
  %vm1015 = vcmask 916480
  %v1016 = vsel %vm1015, %v999, %v868
  %v1017 = vsel %vm1015, %v1000, %v870
  %v1018 = vsel %vm1015, %v1001, %v872
  %v1019 = vsel %vm1015, %v1002, %v874
  %v1020 = vsel %vm1015, %v1003, %v876
  %v1021 = vsel %vm1015, %v1004, %v878
  %v1022 = vsel %vm1015, %v1005, %v880
  %v1023 = vsel %vm1015, %v1006, %v882
  %v1024 = vsel %vm1015, %v1007, %v884
  %v1025 = vsel %vm1015, %v1008, %v886
  %v1026 = vsel %vm1015, %v1009, %v888
  %v1027 = vsel %vm1015, %v1010, %v890
  %v1028 = vsel %vm1015, %v1011, %v892
  %v1029 = vsel %vm1015, %v1012, %v894
  %v1030 = vsel %vm1015, %v1013, %v896
  %v1031 = vsel %vm1015, %v1014, %v898
  %v1032 = vpack.c.bf16 %v1017, %v1016
  %v1033 = vpack.c.bf16 %v452, %v451
  %v1034 = vpack.c.bf16 %v1019, %v1018
  %v1035 = vpack.c.bf16 %v454, %v453
  %v1036 = vpack.c.bf16 %v1021, %v1020
  %v1037 = vpack.c.bf16 %v456, %v455
  %v1038 = vpack.c.bf16 %v1023, %v1022
  %v1039 = vpack.c.bf16 %v458, %v457
  %v1040 = vpack.c.bf16 %v1025, %v1024
  %v1041 = vpack.c.bf16 %v460, %v459
  %v1042 = vpack.c.bf16 %v1027, %v1026
  %v1043 = vpack.c.bf16 %v462, %v461
  %v1044 = vpack.c.bf16 %v1029, %v1028
  %v1045 = vpack.c.bf16 %v464, %v463
  %v1046 = vpack.c.bf16 %v1031, %v1030
  %v1047 = vpack.c.bf16 %v466, %v465
  %v1048 = vld [vmem:[%s3] sm:$0xf]
  %v1049 = vld [vmem:[%s3 + $0x4] sm:$0xf]
  %v1050 = vld [vmem:[%s3 + $0x8] sm:$0xf]
  %v1051 = vld [vmem:[%s3 + $0xc] sm:$0xf]
  %v1052 = vld [vmem:[%s3 + $0x10] sm:$0xf]
  %v1053 = vld [vmem:[%s3 + $0x14] sm:$0xf]
  %v1054 = vld [vmem:[%s3 + $0x18] sm:$0xf]
  %v1055 = vld [vmem:[%s3 + $0x1c] sm:$0xf]
  %v1056 = vld [vmem:[%s3 + $0x20] sm:$0xf]
  %v1057 = vld [vmem:[%s3 + $0x24] sm:$0xf]
  %v1058 = vld [vmem:[%s3 + $0x28] sm:$0xf]
  %v1059 = vld [vmem:[%s3 + $0x2c] sm:$0xf]
  %v1060 = vld [vmem:[%s3 + $0x30] sm:$0xf]
  %v1061 = vld [vmem:[%s3 + $0x34] sm:$0xf]
  %v1062 = vld [vmem:[%s3 + $0x38] sm:$0xf]
  %v1063 = vld [vmem:[%s3 + $0x3c] sm:$0xf]
  %v1064 = vld [vmem:[%s3 + $0x40] sm:$0xf]
  %v1065 = vld [vmem:[%s3 + $0x44] sm:$0xf]
  %v1066 = vld [vmem:[%s4] sm:$0x1]
  %v1068 = vlaneseq
  %v1069 = vshrl.u32 %v1068, 7
  %v1070 = vsub.s32 0, %v1069
  %v1071 = vrot.slane %v1066, %v1070
  %v1091 = vunpack.c.l.b16 %v1048
  %v1092 = vunpack.c.l.b16 %v1049
  %v1093 = vunpack.c.l.b16 %v1050
  %v1094 = vunpack.c.l.b16 %v1051
  %v1095 = vunpack.c.l.b16 %v1052
  %v1096 = vunpack.c.l.b16 %v1053
  %v1097 = vunpack.c.l.b16 %v1054
  %v1098 = vunpack.c.l.b16 %v1055
  %v1099 = vunpack.c.l.b16 %v1056
  %v1100 = vunpack.c.l.b16 %v1057
  %v1101 = vunpack.c.l.b16 %v1058
  %v1102 = vunpack.c.l.b16 %v1059
  %v1103 = vunpack.c.l.b16 %v1060
  %v1104 = vunpack.c.l.b16 %v1061
  %v1105 = vunpack.c.l.b16 %v1062
  %v1106 = vunpack.c.l.b16 %v1063
  %v1107 = vunpack.c.l.b16 %v1064
  %v1108 = vunpack.c.l.b16 %v1065
  %v1109 = vpack.c.b16 %v1092, %v1091
  %v1110 = vpack.c.b16 %v1094, %v1093
  %v1111 = vpack.c.b16 %v1096, %v1095
  %v1112 = vpack.c.b16 %v1098, %v1097
  %v1113 = vpack.c.b16 %v1100, %v1099
  %v1114 = vpack.c.b16 %v1102, %v1101
  %v1115 = vpack.c.b16 %v1104, %v1103
  %v1116 = vpack.c.b16 %v1106, %v1105
  %v1117 = vpack.c.b16 %v1108, %v1107
  %v1128 = vsel %vm253, %v1033, 0
  %v1131 = vsel %vm253, %v1035, 0
  %v1134 = vsel %vm253, %v1037, 0
  %v1137 = vsel %vm253, %v1039, 0
  %v1140 = vsel %vm253, %v1041, 0
  %v1143 = vsel %vm253, %v1043, 0
  %v1146 = vsel %vm253, %v1045, 0
  %v1149 = vsel %vm253, %v1047, 0
  %1151 = vmatprep.subr.bf16.mxu0 0
  %1152 = vmatpush1.bf16.msra.mxu0 %v1116
  %1153 = vmatprep.subr.bf16.mxu0 0
  %1154 = vmatpush1.bf16.msra.mxu0 %v1115
  %1155 = vmatprep.subr.bf16.mxu0 0
  %1156 = vmatpush1.bf16.msra.mxu0 %v1114
  %1157 = vmatprep.subr.bf16.mxu0 0
  %1158 = vmatpush1.bf16.msra.mxu0 %v1113
  %1159 = vmatprep.subr.bf16.mxu0 0
  %1160 = vmatpush1.bf16.msra.mxu0 %v1112
  %1161 = vmatprep.subr.bf16.mxu0 0
  %1162 = vmatpush1.bf16.msra.mxu0 %v1111
  %1163 = vmatprep.subr.bf16.mxu0 0
  %1164 = vmatpush1.bf16.msra.mxu0 %v1110
  %1165 = vmatprep.subr.bf16.mxu0 0
  %1166 = vmatpush1.bf16.msra.mxu0 %v1109
  %1167 = vmatprep.subr.bf16.mxu0 0
  %1168 = vmatpush2.bf16.msra.mxu0 0
  %1169 = vmatprep.subr.bf16.mxu0 0
  %1170 = vmatpush2.bf16.msra.mxu0 0
  %1171 = vmatprep.subr.bf16.mxu0 0
  %1172 = vmatpush2.bf16.msra.mxu0 0
  %1173 = vmatprep.subr.bf16.mxu0 0
  %1174 = vmatpush2.bf16.msra.mxu0 0
  %1175 = vmatprep.subr.bf16.mxu0 0
  %1176 = vmatpush2.bf16.msra.mxu0 0
  %1177 = vmatprep.subr.bf16.mxu0 0
  %1178 = vmatpush2.bf16.msra.mxu0 0
  %1179 = vmatprep.subr.bf16.mxu0 0
  %1180 = vmatpush2.bf16.msra.mxu0 0
  %1181 = vmatprep.subr.bf16.mxu0 0
  %1182 = vmatpush2.bf16.msra.mxu0 %v1117
  %1183 = vmatprep.mubr.bf16.mxu0 %v1128
  %1184 = vmatmul.mubr.bf16.gmra.mxu0 %v1032
  %v1185 = vpop.f32.mrf.mxu0
  %v1186 = vadd.f32 %v1071, %v1185
  %v1187 = vpop.f32.mrf.mxu0
  %v1188 = vpop.f32.mrf.mxu0
  %v1189 = vadd.f32 %v1071, %v1188
  %v1190 = vpop.f32.mrf.mxu0
  %1191 = vmatprep.mubr.bf16.mxu0 %v1131
  %1192 = vmatmul.mubr.bf16.gmra.mxu0 %v1034
  %v1193 = vpop.f32.mrf.mxu0
  %v1194 = vadd.f32 %v1071, %v1193
  %v1195 = vpop.f32.mrf.mxu0
  %v1196 = vpop.f32.mrf.mxu0
  %v1197 = vadd.f32 %v1071, %v1196
  %v1198 = vpop.f32.mrf.mxu0
  %1199 = vmatprep.mubr.bf16.mxu0 %v1134
  %1200 = vmatmul.mubr.bf16.gmra.mxu0 %v1036
  %v1201 = vpop.f32.mrf.mxu0
  %v1202 = vadd.f32 %v1071, %v1201
  %v1203 = vpop.f32.mrf.mxu0
  %v1204 = vpop.f32.mrf.mxu0
  %v1205 = vadd.f32 %v1071, %v1204
  %v1206 = vpop.f32.mrf.mxu0
  %1207 = vmatprep.mubr.bf16.mxu0 %v1137
  %1208 = vmatmul.mubr.bf16.gmra.mxu0 %v1038
  %v1209 = vpop.f32.mrf.mxu0
  %v1210 = vadd.f32 %v1071, %v1209
  %v1211 = vpop.f32.mrf.mxu0
  %v1212 = vpop.f32.mrf.mxu0
  %v1213 = vadd.f32 %v1071, %v1212
  %v1214 = vpop.f32.mrf.mxu0
  %1215 = vmatprep.mubr.bf16.mxu0 %v1140
  %1216 = vmatmul.mubr.bf16.gmra.mxu0 %v1040
  %v1217 = vpop.f32.mrf.mxu0
  %v1218 = vadd.f32 %v1071, %v1217
  %v1219 = vpop.f32.mrf.mxu0
  %v1220 = vpop.f32.mrf.mxu0
  %v1221 = vadd.f32 %v1071, %v1220
  %v1222 = vpop.f32.mrf.mxu0
  %1223 = vmatprep.mubr.bf16.mxu0 %v1143
  %1224 = vmatmul.mubr.bf16.gmra.mxu0 %v1042
  %v1225 = vpop.f32.mrf.mxu0
  %v1226 = vadd.f32 %v1071, %v1225
  %v1227 = vpop.f32.mrf.mxu0
  %v1228 = vpop.f32.mrf.mxu0
  %v1229 = vadd.f32 %v1071, %v1228
  %v1230 = vpop.f32.mrf.mxu0
  %1231 = vmatprep.mubr.bf16.mxu0 %v1146
  %1232 = vmatmul.mubr.bf16.gmra.mxu0 %v1044
  %v1233 = vpop.f32.mrf.mxu0
  %v1234 = vadd.f32 %v1071, %v1233
  %v1235 = vpop.f32.mrf.mxu0
  %v1236 = vpop.f32.mrf.mxu0
  %v1237 = vadd.f32 %v1071, %v1236
  %v1238 = vpop.f32.mrf.mxu0
  %1239 = vmatprep.mubr.bf16.mxu0 %v1149
  %1240 = vmatmul.mubr.bf16.gmra.mxu0 %v1046
  %v1241 = vpop.f32.mrf.mxu0
  %v1242 = vadd.f32 %v1071, %v1241
  %v1243 = vpop.f32.mrf.mxu0
  %v1244 = vpop.f32.mrf.mxu0
  %v1245 = vadd.f32 %v1071, %v1244
  %v1246 = vpop.f32.mrf.mxu0
  %1247 = vdwg.mxu0
  %v1248 = vmax.f32 %v1186, 0.0
  %v1249 = vmax.f32 %v1189, 0.0
  %v1250 = vmax.f32 %v1194, 0.0
  %v1251 = vmax.f32 %v1197, 0.0
  %v1252 = vmax.f32 %v1202, 0.0
  %v1253 = vmax.f32 %v1205, 0.0
  %v1254 = vmax.f32 %v1210, 0.0
  %v1255 = vmax.f32 %v1213, 0.0
  %v1256 = vmax.f32 %v1218, 0.0
  %v1257 = vmax.f32 %v1221, 0.0
  %v1258 = vmax.f32 %v1226, 0.0
  %v1259 = vmax.f32 %v1229, 0.0
  %v1260 = vmax.f32 %v1234, 0.0
  %v1261 = vmax.f32 %v1237, 0.0
  %v1262 = vmax.f32 %v1242, 0.0
  %v1263 = vmax.f32 %v1245, 0.0
  %1264 = vst.msk [vmem:[#allocation3] sm:$0xff] %vm115, 0.0
  %vm1265 = vcmask 254976
  %1266 = vst.msk [vmem:[#allocation3 + $0x8] sm:$0x3] %vm1265, 0.0
  %1267 = vst.msk [vmem:[#allocation3 + $0xa0] sm:$0xff] %vm115, 0.0
  %1268 = vst.msk [vmem:[#allocation3 + $0xa8] sm:$0x3] %vm1265, 0.0
  %s1269 = scalar_lea.vmem [#allocation3], 144
  %1270 = vst.msk [vmem:[%s1269] sm:$0xff] %vm115, 0.0
  %1271 = vst.msk [vmem:[%s1269 + $0x8] sm:$0x3] %vm1265, 0.0
  %1272 = vst.msk [vmem:[%s1269 + $0xa0] sm:$0xff] %vm115, 0.0
  %1273 = vst.msk [vmem:[%s1269 + $0xa8] sm:$0x3] %vm1265, 0.0
  %vm1274 = vcmask 253952
  %1275 = vst.msk [vmem:[#allocation3] sm:$0x1] %vm1274, 0.0
  %1276 = vst.msk [vmem:[#allocation3 + $0x10] sm:$0x1] %vm1274, 0.0
  %1277 = vst.msk [vmem:[#allocation3 + $0x20] sm:$0x1] %vm1274, 0.0
  %1278 = vst.msk [vmem:[#allocation3 + $0x30] sm:$0x1] %vm1274, 0.0
  %1279 = vst.msk [vmem:[#allocation3 + $0x40] sm:$0x1] %vm1274, 0.0
  %1280 = vst.msk [vmem:[#allocation3 + $0x50] sm:$0x1] %vm1274, 0.0
  %1281 = vst.msk [vmem:[#allocation3 + $0x60] sm:$0x1] %vm1274, 0.0
  %1282 = vst.msk [vmem:[#allocation3 + $0x70] sm:$0x1] %vm1274, 0.0
  %1283 = vst.msk [vmem:[#allocation3 + $0x80] sm:$0x1] %vm1274, 0.0
  %1284 = vst.msk [vmem:[#allocation3 + $0x90] sm:$0x1] %vm1274, 0.0
  %1285 = vst.msk [vmem:[#allocation3 + $0xa0] sm:$0x1] %vm1274, 0.0
  %1286 = vst.msk [vmem:[#allocation3 + $0xb0] sm:$0x1] %vm1274, 0.0
  %1287 = vst.msk [vmem:[#allocation3 + $0xc0] sm:$0x1] %vm1274, 0.0
  %1288 = vst.msk [vmem:[#allocation3 + $0xd0] sm:$0x1] %vm1274, 0.0
  %1289 = vst.msk [vmem:[#allocation3 + $0xe0] sm:$0x1] %vm1274, 0.0
  %1290 = vst.msk [vmem:[#allocation3 + $0xf0] sm:$0x1] %vm1274, 0.0
  %1291 = vst.msk [vmem:[#allocation3 + $0x100] sm:$0x1] %vm1274, 0.0
  %1292 = vst.msk [vmem:[#allocation3 + $0x110] sm:$0x1] %vm1274, 0.0
  %1293 = vst.msk [vmem:[#allocation3 + $0x120] sm:$0x1] %vm1274, 0.0
  %1294 = vst.msk [vmem:[#allocation3 + $0x130] sm:$0x1] %vm1274, 0.0
  %1295 = vst.msk [vmem:[#allocation3 + $0x9] sm:$0x1] %vm1274, 0.0
  %1296 = vst.msk [vmem:[#allocation3 + $0x19] sm:$0x1] %vm1274, 0.0
  %1297 = vst.msk [vmem:[#allocation3 + $0x29] sm:$0x1] %vm1274, 0.0
  %1298 = vst.msk [vmem:[#allocation3 + $0x39] sm:$0x1] %vm1274, 0.0
  %1299 = vst.msk [vmem:[#allocation3 + $0x49] sm:$0x1] %vm1274, 0.0
  %1300 = vst.msk [vmem:[#allocation3 + $0x59] sm:$0x1] %vm1274, 0.0
  %1301 = vst.msk [vmem:[#allocation3 + $0x69] sm:$0x1] %vm1274, 0.0
  %1302 = vst.msk [vmem:[#allocation3 + $0x79] sm:$0x1] %vm1274, 0.0
  %1303 = vst.msk [vmem:[#allocation3 + $0x89] sm:$0x1] %vm1274, 0.0
  %1304 = vst.msk [vmem:[#allocation3 + $0x99] sm:$0x1] %vm1274, 0.0
  %1305 = vst.msk [vmem:[#allocation3 + $0xa9] sm:$0x1] %vm1274, 0.0
  %1306 = vst.msk [vmem:[#allocation3 + $0xb9] sm:$0x1] %vm1274, 0.0
  %1307 = vst.msk [vmem:[#allocation3 + $0xc9] sm:$0x1] %vm1274, 0.0
  %1308 = vst.msk [vmem:[#allocation3 + $0xd9] sm:$0x1] %vm1274, 0.0
  %1309 = vst.msk [vmem:[#allocation3 + $0xe9] sm:$0x1] %vm1274, 0.0
  %1310 = vst.msk [vmem:[#allocation3 + $0xf9] sm:$0x1] %vm1274, 0.0
  %1311 = vst.msk [vmem:[#allocation3 + $0x109] sm:$0x1] %vm1274, 0.0
  %1312 = vst.msk [vmem:[#allocation3 + $0x119] sm:$0x1] %vm1274, 0.0
  %1313 = vst.msk [vmem:[#allocation3 + $0x129] sm:$0x1] %vm1274, 0.0
  %1314 = vst.msk [vmem:[#allocation3 + $0x139] sm:$0x1] %vm1274, 0.0
  %s1315 = scalar_lea.vmem [#allocation3], 16
  %1316 = vst.msk [vmem:[%s1315 + $0x1] sm:$0xff] %vm115, %v1248
  %1317 = vst.msk [vmem:[%s1315 + $0x11] sm:$0xff] %vm115, %v1249
  %1318 = vst.msk [vmem:[%s1315 + $0x21] sm:$0xff] %vm115, %v1250
  %1319 = vst.msk [vmem:[%s1315 + $0x31] sm:$0xff] %vm115, %v1251
  %1320 = vst.msk [vmem:[%s1315 + $0x41] sm:$0xff] %vm115, %v1252
  %1321 = vst.msk [vmem:[%s1315 + $0x51] sm:$0xff] %vm115, %v1253
  %1322 = vst.msk [vmem:[%s1315 + $0x61] sm:$0xff] %vm115, %v1254
  %1323 = vst.msk [vmem:[%s1315 + $0x71] sm:$0xff] %vm115, %v1255
  %1324 = vst.msk [vmem:[%s1315 + $0xa1] sm:$0xff] %vm115, %v1256
  %1325 = vst.msk [vmem:[%s1315 + $0xb1] sm:$0xff] %vm115, %v1257
  %1326 = vst.msk [vmem:[%s1315 + $0xc1] sm:$0xff] %vm115, %v1258
  %1327 = vst.msk [vmem:[%s1315 + $0xd1] sm:$0xff] %vm115, %v1259
  %1328 = vst.msk [vmem:[%s1315 + $0xe1] sm:$0xff] %vm115, %v1260
  %1329 = vst.msk [vmem:[%s1315 + $0xf1] sm:$0xff] %vm115, %v1261
  %1330 = vst.msk [vmem:[%s1315 + $0x101] sm:$0xff] %vm115, %v1262
  %1331 = vst.msk [vmem:[%s1315 + $0x111] sm:$0xff] %vm115, %v1263
  %v1332 = vld [vmem:[#allocation3] sm:$0xff]
  %v1333 = vld [vmem:[#allocation3 + $0x10] sm:$0xff]
  %v1334 = vld [vmem:[#allocation3 + $0x20] sm:$0xff]
  %v1335 = vld [vmem:[#allocation3 + $0x30] sm:$0xff]
  %v1336 = vld [vmem:[#allocation3 + $0x40] sm:$0xff]
  %v1337 = vld [vmem:[#allocation3 + $0x50] sm:$0xff]
  %v1338 = vld [vmem:[#allocation3 + $0x60] sm:$0xff]
  %v1339 = vld [vmem:[#allocation3 + $0x70] sm:$0xff]
  %v1340 = vld [vmem:[#allocation3 + $0xa0] sm:$0xff]
  %v1341 = vld [vmem:[#allocation3 + $0xb0] sm:$0xff]
  %v1342 = vld [vmem:[#allocation3 + $0xc0] sm:$0xff]
  %v1343 = vld [vmem:[#allocation3 + $0xd0] sm:$0xff]
  %v1344 = vld [vmem:[#allocation3 + $0xe0] sm:$0xff]
  %v1345 = vld [vmem:[#allocation3 + $0xf0] sm:$0xff]
  %v1346 = vld [vmem:[#allocation3 + $0x100] sm:$0xff]
  %v1347 = vld [vmem:[#allocation3 + $0x110] sm:$0xff]
  %v1348 = vld [vmem:[#allocation3 + $0x1] sm:$0xff]
  %v1349 = vld [vmem:[#allocation3 + $0x11] sm:$0xff]
  %v1350 = vld [vmem:[#allocation3 + $0x21] sm:$0xff]
  %v1351 = vld [vmem:[#allocation3 + $0x31] sm:$0xff]
  %v1352 = vld [vmem:[#allocation3 + $0x41] sm:$0xff]
  %v1353 = vld [vmem:[#allocation3 + $0x51] sm:$0xff]
  %v1354 = vld [vmem:[#allocation3 + $0x61] sm:$0xff]
  %v1355 = vld [vmem:[#allocation3 + $0x71] sm:$0xff]
  %v1356 = vld [vmem:[#allocation3 + $0xa1] sm:$0xff]
  %v1357 = vld [vmem:[#allocation3 + $0xb1] sm:$0xff]
  %v1358 = vld [vmem:[#allocation3 + $0xc1] sm:$0xff]
  %v1359 = vld [vmem:[#allocation3 + $0xd1] sm:$0xff]
  %v1360 = vld [vmem:[#allocation3 + $0xe1] sm:$0xff]
  %v1361 = vld [vmem:[#allocation3 + $0xf1] sm:$0xff]
  %v1362 = vld [vmem:[#allocation3 + $0x101] sm:$0xff]
  %v1363 = vld [vmem:[#allocation3 + $0x111] sm:$0xff]
  %v1364 = vld [vmem:[#allocation3 + $0x2] sm:$0xff]
  %v1365 = vld [vmem:[#allocation3 + $0x12] sm:$0xff]
  %v1366 = vld [vmem:[#allocation3 + $0x22] sm:$0xff]
  %v1367 = vld [vmem:[#allocation3 + $0x32] sm:$0xff]
  %v1368 = vld [vmem:[#allocation3 + $0x42] sm:$0xff]
  %v1369 = vld [vmem:[#allocation3 + $0x52] sm:$0xff]
  %v1370 = vld [vmem:[#allocation3 + $0x62] sm:$0xff]
  %v1371 = vld [vmem:[#allocation3 + $0x72] sm:$0xff]
  %v1372 = vld [vmem:[#allocation3 + $0xa2] sm:$0xff]
  %v1373 = vld [vmem:[#allocation3 + $0xb2] sm:$0xff]
  %v1374 = vld [vmem:[#allocation3 + $0xc2] sm:$0xff]
  %v1375 = vld [vmem:[#allocation3 + $0xd2] sm:$0xff]
  %v1376 = vld [vmem:[#allocation3 + $0xe2] sm:$0xff]
  %v1377 = vld [vmem:[#allocation3 + $0xf2] sm:$0xff]
  %v1378 = vld [vmem:[#allocation3 + $0x102] sm:$0xff]
  %v1379 = vld [vmem:[#allocation3 + $0x112] sm:$0xff]
  %v1380 = vld [vmem:[%s1315] sm:$0xff]
  %v1381 = vld [vmem:[%s1315 + $0x10] sm:$0xff]
  %v1382 = vld [vmem:[%s1315 + $0x20] sm:$0xff]
  %v1383 = vld [vmem:[%s1315 + $0x30] sm:$0xff]
  %v1384 = vld [vmem:[%s1315 + $0x40] sm:$0xff]
  %v1385 = vld [vmem:[%s1315 + $0x50] sm:$0xff]
  %v1386 = vld [vmem:[%s1315 + $0x60] sm:$0xff]
  %v1387 = vld [vmem:[%s1315 + $0x70] sm:$0xff]
  %v1388 = vld [vmem:[%s1315 + $0xa0] sm:$0xff]
  %v1389 = vld [vmem:[%s1315 + $0xb0] sm:$0xff]
  %v1390 = vld [vmem:[%s1315 + $0xc0] sm:$0xff]
  %v1391 = vld [vmem:[%s1315 + $0xd0] sm:$0xff]
  %v1392 = vld [vmem:[%s1315 + $0xe0] sm:$0xff]
  %v1393 = vld [vmem:[%s1315 + $0xf0] sm:$0xff]
  %v1394 = vld [vmem:[%s1315 + $0x100] sm:$0xff]
  %v1395 = vld [vmem:[%s1315 + $0x110] sm:$0xff]
  %v1396 = vld [vmem:[%s1315 + $0x1] sm:$0xff]
  %v1397 = vld [vmem:[%s1315 + $0x11] sm:$0xff]
  %v1398 = vld [vmem:[%s1315 + $0x21] sm:$0xff]
  %v1399 = vld [vmem:[%s1315 + $0x31] sm:$0xff]
  %v1400 = vld [vmem:[%s1315 + $0x41] sm:$0xff]
  %v1401 = vld [vmem:[%s1315 + $0x51] sm:$0xff]
  %v1402 = vld [vmem:[%s1315 + $0x61] sm:$0xff]
  %v1403 = vld [vmem:[%s1315 + $0x71] sm:$0xff]
  %v1404 = vld [vmem:[%s1315 + $0xa1] sm:$0xff]
  %v1405 = vld [vmem:[%s1315 + $0xb1] sm:$0xff]
  %v1406 = vld [vmem:[%s1315 + $0xc1] sm:$0xff]
  %v1407 = vld [vmem:[%s1315 + $0xd1] sm:$0xff]
  %v1408 = vld [vmem:[%s1315 + $0xe1] sm:$0xff]
  %v1409 = vld [vmem:[%s1315 + $0xf1] sm:$0xff]
  %v1410 = vld [vmem:[%s1315 + $0x101] sm:$0xff]
  %v1411 = vld [vmem:[%s1315 + $0x111] sm:$0xff]
  %v1412 = vld [vmem:[%s1315 + $0x2] sm:$0xff]
  %v1413 = vld [vmem:[%s1315 + $0x12] sm:$0xff]
  %v1414 = vld [vmem:[%s1315 + $0x22] sm:$0xff]
  %v1415 = vld [vmem:[%s1315 + $0x32] sm:$0xff]
  %v1416 = vld [vmem:[%s1315 + $0x42] sm:$0xff]
  %v1417 = vld [vmem:[%s1315 + $0x52] sm:$0xff]
  %v1418 = vld [vmem:[%s1315 + $0x62] sm:$0xff]
  %v1419 = vld [vmem:[%s1315 + $0x72] sm:$0xff]
  %v1420 = vld [vmem:[%s1315 + $0xa2] sm:$0xff]
  %v1421 = vld [vmem:[%s1315 + $0xb2] sm:$0xff]
  %v1422 = vld [vmem:[%s1315 + $0xc2] sm:$0xff]
  %v1423 = vld [vmem:[%s1315 + $0xd2] sm:$0xff]
  %v1424 = vld [vmem:[%s1315 + $0xe2] sm:$0xff]
  %v1425 = vld [vmem:[%s1315 + $0xf2] sm:$0xff]
  %v1426 = vld [vmem:[%s1315 + $0x102] sm:$0xff]
  %v1427 = vld [vmem:[%s1315 + $0x112] sm:$0xff]
  %s1428 = scalar_lea.vmem [#allocation3], 32
  %v1429 = vld [vmem:[%s1428] sm:$0xff]
  %v1430 = vld [vmem:[%s1428 + $0x10] sm:$0xff]
  %v1431 = vld [vmem:[%s1428 + $0x20] sm:$0xff]
  %v1432 = vld [vmem:[%s1428 + $0x30] sm:$0xff]
  %v1433 = vld [vmem:[%s1428 + $0x40] sm:$0xff]
  %v1434 = vld [vmem:[%s1428 + $0x50] sm:$0xff]
  %v1435 = vld [vmem:[%s1428 + $0x60] sm:$0xff]
  %v1436 = vld [vmem:[%s1428 + $0x70] sm:$0xff]
  %v1437 = vld [vmem:[%s1428 + $0xa0] sm:$0xff]
  %v1438 = vld [vmem:[%s1428 + $0xb0] sm:$0xff]
  %v1439 = vld [vmem:[%s1428 + $0xc0] sm:$0xff]
  %v1440 = vld [vmem:[%s1428 + $0xd0] sm:$0xff]
  %v1441 = vld [vmem:[%s1428 + $0xe0] sm:$0xff]
  %v1442 = vld [vmem:[%s1428 + $0xf0] sm:$0xff]
  %v1443 = vld [vmem:[%s1428 + $0x100] sm:$0xff]
  %v1444 = vld [vmem:[%s1428 + $0x110] sm:$0xff]
  %v1445 = vld [vmem:[%s1428 + $0x1] sm:$0xff]
  %v1446 = vld [vmem:[%s1428 + $0x11] sm:$0xff]
  %v1447 = vld [vmem:[%s1428 + $0x21] sm:$0xff]
  %v1448 = vld [vmem:[%s1428 + $0x31] sm:$0xff]
  %v1449 = vld [vmem:[%s1428 + $0x41] sm:$0xff]
  %v1450 = vld [vmem:[%s1428 + $0x51] sm:$0xff]
  %v1451 = vld [vmem:[%s1428 + $0x61] sm:$0xff]
  %v1452 = vld [vmem:[%s1428 + $0x71] sm:$0xff]
  %v1453 = vld [vmem:[%s1428 + $0xa1] sm:$0xff]
  %v1454 = vld [vmem:[%s1428 + $0xb1] sm:$0xff]
  %v1455 = vld [vmem:[%s1428 + $0xc1] sm:$0xff]
  %v1456 = vld [vmem:[%s1428 + $0xd1] sm:$0xff]
  %v1457 = vld [vmem:[%s1428 + $0xe1] sm:$0xff]
  %v1458 = vld [vmem:[%s1428 + $0xf1] sm:$0xff]
  %v1459 = vld [vmem:[%s1428 + $0x101] sm:$0xff]
  %v1460 = vld [vmem:[%s1428 + $0x111] sm:$0xff]
  %v1461 = vld [vmem:[%s1428 + $0x2] sm:$0xff]
  %v1462 = vld [vmem:[%s1428 + $0x12] sm:$0xff]
  %v1463 = vld [vmem:[%s1428 + $0x22] sm:$0xff]
  %v1464 = vld [vmem:[%s1428 + $0x32] sm:$0xff]
  %v1465 = vld [vmem:[%s1428 + $0x42] sm:$0xff]
  %v1466 = vld [vmem:[%s1428 + $0x52] sm:$0xff]
  %v1467 = vld [vmem:[%s1428 + $0x62] sm:$0xff]
  %v1468 = vld [vmem:[%s1428 + $0x72] sm:$0xff]
  %v1469 = vld [vmem:[%s1428 + $0xa2] sm:$0xff]
  %v1470 = vld [vmem:[%s1428 + $0xb2] sm:$0xff]
  %v1471 = vld [vmem:[%s1428 + $0xc2] sm:$0xff]
  %v1472 = vld [vmem:[%s1428 + $0xd2] sm:$0xff]
  %v1473 = vld [vmem:[%s1428 + $0xe2] sm:$0xff]
  %v1474 = vld [vmem:[%s1428 + $0xf2] sm:$0xff]
  %v1475 = vld [vmem:[%s1428 + $0x102] sm:$0xff]
  %v1476 = vld [vmem:[%s1428 + $0x112] sm:$0xff]
  %1493 = vrot.lane.b32.xlu0 %v1348, 32
  %v1494 = vpop.permute.xlu0 %1493
  %1495 = vrot.lane.b32.xlu0 %v1349, 32
  %v1496 = vpop.permute.xlu0 %1495
  %1497 = vrot.lane.b32.xlu0 %v1350, 32
  %v1498 = vpop.permute.xlu0 %1497
  %1499 = vrot.lane.b32.xlu0 %v1351, 32
  %v1500 = vpop.permute.xlu0 %1499
  %1501 = vrot.lane.b32.xlu0 %v1352, 32
  %v1502 = vpop.permute.xlu0 %1501
  %1503 = vrot.lane.b32.xlu0 %v1353, 32
  %v1504 = vpop.permute.xlu0 %1503
  %1505 = vrot.lane.b32.xlu0 %v1354, 32
  %v1506 = vpop.permute.xlu0 %1505
  %1507 = vrot.lane.b32.xlu0 %v1355, 32
  %v1508 = vpop.permute.xlu0 %1507
  %1509 = vrot.lane.b32.xlu0 %v1356, 32
  %v1510 = vpop.permute.xlu0 %1509
  %1511 = vrot.lane.b32.xlu0 %v1357, 32
  %v1512 = vpop.permute.xlu0 %1511
  %1513 = vrot.lane.b32.xlu0 %v1358, 32
  %v1514 = vpop.permute.xlu0 %1513
  %1515 = vrot.lane.b32.xlu0 %v1359, 32
  %v1516 = vpop.permute.xlu0 %1515
  %1517 = vrot.lane.b32.xlu0 %v1360, 32
  %v1518 = vpop.permute.xlu0 %1517
  %1519 = vrot.lane.b32.xlu0 %v1361, 32
  %v1520 = vpop.permute.xlu0 %1519
  %1521 = vrot.lane.b32.xlu0 %v1362, 32
  %v1522 = vpop.permute.xlu0 %1521
  %1523 = vrot.lane.b32.xlu0 %v1363, 32
  %v1524 = vpop.permute.xlu0 %1523
  %1557 = vrot.lane.b32.xlu0 %v1364, 64
  %v1558 = vpop.permute.xlu0 %1557
  %1559 = vrot.lane.b32.xlu0 %v1365, 64
  %v1560 = vpop.permute.xlu0 %1559
  %1561 = vrot.lane.b32.xlu0 %v1366, 64
  %v1562 = vpop.permute.xlu0 %1561
  %1563 = vrot.lane.b32.xlu0 %v1367, 64
  %v1564 = vpop.permute.xlu0 %1563
  %1565 = vrot.lane.b32.xlu0 %v1368, 64
  %v1566 = vpop.permute.xlu0 %1565
  %1567 = vrot.lane.b32.xlu0 %v1369, 64
  %v1568 = vpop.permute.xlu0 %1567
  %1569 = vrot.lane.b32.xlu0 %v1370, 64
  %v1570 = vpop.permute.xlu0 %1569
  %1571 = vrot.lane.b32.xlu0 %v1371, 64
  %v1572 = vpop.permute.xlu0 %1571
  %1573 = vrot.lane.b32.xlu0 %v1372, 64
  %v1574 = vpop.permute.xlu0 %1573
  %1575 = vrot.lane.b32.xlu0 %v1373, 64
  %v1576 = vpop.permute.xlu0 %1575
  %1577 = vrot.lane.b32.xlu0 %v1374, 64
  %v1578 = vpop.permute.xlu0 %1577
  %1579 = vrot.lane.b32.xlu0 %v1375, 64
  %v1580 = vpop.permute.xlu0 %1579
  %1581 = vrot.lane.b32.xlu0 %v1376, 64
  %v1582 = vpop.permute.xlu0 %1581
  %1583 = vrot.lane.b32.xlu0 %v1377, 64
  %v1584 = vpop.permute.xlu0 %1583
  %1585 = vrot.lane.b32.xlu0 %v1378, 64
  %v1586 = vpop.permute.xlu0 %1585
  %1587 = vrot.lane.b32.xlu0 %v1379, 64
  %v1588 = vpop.permute.xlu0 %1587
  %1621 = vrot.lane.b32.xlu0 %v1380, 96
  %v1622 = vpop.permute.xlu0 %1621
  %1623 = vrot.lane.b32.xlu0 %v1381, 96
  %v1624 = vpop.permute.xlu0 %1623
  %1625 = vrot.lane.b32.xlu0 %v1382, 96
  %v1626 = vpop.permute.xlu0 %1625
  %1627 = vrot.lane.b32.xlu0 %v1383, 96
  %v1628 = vpop.permute.xlu0 %1627
  %1629 = vrot.lane.b32.xlu0 %v1384, 96
  %v1630 = vpop.permute.xlu0 %1629
  %1631 = vrot.lane.b32.xlu0 %v1385, 96
  %v1632 = vpop.permute.xlu0 %1631
  %1633 = vrot.lane.b32.xlu0 %v1386, 96
  %v1634 = vpop.permute.xlu0 %1633
  %1635 = vrot.lane.b32.xlu0 %v1387, 96
  %v1636 = vpop.permute.xlu0 %1635
  %1637 = vrot.lane.b32.xlu0 %v1388, 96
  %v1638 = vpop.permute.xlu0 %1637
  %1639 = vrot.lane.b32.xlu0 %v1389, 96
  %v1640 = vpop.permute.xlu0 %1639
  %1641 = vrot.lane.b32.xlu0 %v1390, 96
  %v1642 = vpop.permute.xlu0 %1641
  %1643 = vrot.lane.b32.xlu0 %v1391, 96
  %v1644 = vpop.permute.xlu0 %1643
  %1645 = vrot.lane.b32.xlu0 %v1392, 96
  %v1646 = vpop.permute.xlu0 %1645
  %1647 = vrot.lane.b32.xlu0 %v1393, 96
  %v1648 = vpop.permute.xlu0 %1647
  %1649 = vrot.lane.b32.xlu0 %v1394, 96
  %v1650 = vpop.permute.xlu0 %1649
  %1651 = vrot.lane.b32.xlu0 %v1395, 96
  %v1652 = vpop.permute.xlu0 %1651
  %1685 = vrot.lane.b32.xlu0 %v1412, 32
  %v1686 = vpop.permute.xlu0 %1685
  %1687 = vrot.lane.b32.xlu0 %v1413, 32
  %v1688 = vpop.permute.xlu0 %1687
  %1689 = vrot.lane.b32.xlu0 %v1414, 32
  %v1690 = vpop.permute.xlu0 %1689
  %1691 = vrot.lane.b32.xlu0 %v1415, 32
  %v1692 = vpop.permute.xlu0 %1691
  %1693 = vrot.lane.b32.xlu0 %v1416, 32
  %v1694 = vpop.permute.xlu0 %1693
  %1695 = vrot.lane.b32.xlu0 %v1417, 32
  %v1696 = vpop.permute.xlu0 %1695
  %1697 = vrot.lane.b32.xlu0 %v1418, 32
  %v1698 = vpop.permute.xlu0 %1697
  %1699 = vrot.lane.b32.xlu0 %v1419, 32
  %v1700 = vpop.permute.xlu0 %1699
  %1701 = vrot.lane.b32.xlu0 %v1420, 32
  %v1702 = vpop.permute.xlu0 %1701
  %1703 = vrot.lane.b32.xlu0 %v1421, 32
  %v1704 = vpop.permute.xlu0 %1703
  %1705 = vrot.lane.b32.xlu0 %v1422, 32
  %v1706 = vpop.permute.xlu0 %1705
  %1707 = vrot.lane.b32.xlu0 %v1423, 32
  %v1708 = vpop.permute.xlu0 %1707
  %1709 = vrot.lane.b32.xlu0 %v1424, 32
  %v1710 = vpop.permute.xlu0 %1709
  %1711 = vrot.lane.b32.xlu0 %v1425, 32
  %v1712 = vpop.permute.xlu0 %1711
  %1713 = vrot.lane.b32.xlu0 %v1426, 32
  %v1714 = vpop.permute.xlu0 %1713
  %1715 = vrot.lane.b32.xlu0 %v1427, 32
  %v1716 = vpop.permute.xlu0 %1715
  %1749 = vrot.lane.b32.xlu0 %v1429, 64
  %v1750 = vpop.permute.xlu0 %1749
  %1751 = vrot.lane.b32.xlu0 %v1430, 64
  %v1752 = vpop.permute.xlu0 %1751
  %1753 = vrot.lane.b32.xlu0 %v1431, 64
  %v1754 = vpop.permute.xlu0 %1753
  %1755 = vrot.lane.b32.xlu0 %v1432, 64
  %v1756 = vpop.permute.xlu0 %1755
  %1757 = vrot.lane.b32.xlu0 %v1433, 64
  %v1758 = vpop.permute.xlu0 %1757
  %1759 = vrot.lane.b32.xlu0 %v1434, 64
  %v1760 = vpop.permute.xlu0 %1759
  %1761 = vrot.lane.b32.xlu0 %v1435, 64
  %v1762 = vpop.permute.xlu0 %1761
  %1763 = vrot.lane.b32.xlu0 %v1436, 64
  %v1764 = vpop.permute.xlu0 %1763
  %1765 = vrot.lane.b32.xlu0 %v1437, 64
  %v1766 = vpop.permute.xlu0 %1765
  %1767 = vrot.lane.b32.xlu0 %v1438, 64
  %v1768 = vpop.permute.xlu0 %1767
  %1769 = vrot.lane.b32.xlu0 %v1439, 64
  %v1770 = vpop.permute.xlu0 %1769
  %1771 = vrot.lane.b32.xlu0 %v1440, 64
  %v1772 = vpop.permute.xlu0 %1771
  %1773 = vrot.lane.b32.xlu0 %v1441, 64
  %v1774 = vpop.permute.xlu0 %1773
  %1775 = vrot.lane.b32.xlu0 %v1442, 64
  %v1776 = vpop.permute.xlu0 %1775
  %1777 = vrot.lane.b32.xlu0 %v1443, 64
  %v1778 = vpop.permute.xlu0 %1777
  %1779 = vrot.lane.b32.xlu0 %v1444, 64
  %v1780 = vpop.permute.xlu0 %1779
  %1813 = vrot.lane.b32.xlu0 %v1445, 96
  %v1814 = vpop.permute.xlu0 %1813
  %1815 = vrot.lane.b32.xlu0 %v1446, 96
  %v1816 = vpop.permute.xlu0 %1815
  %1817 = vrot.lane.b32.xlu0 %v1447, 96
  %v1818 = vpop.permute.xlu0 %1817
  %1819 = vrot.lane.b32.xlu0 %v1448, 96
  %v1820 = vpop.permute.xlu0 %1819
  %1821 = vrot.lane.b32.xlu0 %v1449, 96
  %v1822 = vpop.permute.xlu0 %1821
  %1823 = vrot.lane.b32.xlu0 %v1450, 96
  %v1824 = vpop.permute.xlu0 %1823
  %1825 = vrot.lane.b32.xlu0 %v1451, 96
  %v1826 = vpop.permute.xlu0 %1825
  %1827 = vrot.lane.b32.xlu0 %v1452, 96
  %v1828 = vpop.permute.xlu0 %1827
  %1829 = vrot.lane.b32.xlu0 %v1453, 96
  %v1830 = vpop.permute.xlu0 %1829
  %1831 = vrot.lane.b32.xlu0 %v1454, 96
  %v1832 = vpop.permute.xlu0 %1831
  %1833 = vrot.lane.b32.xlu0 %v1455, 96
  %v1834 = vpop.permute.xlu0 %1833
  %1835 = vrot.lane.b32.xlu0 %v1456, 96
  %v1836 = vpop.permute.xlu0 %1835
  %1837 = vrot.lane.b32.xlu0 %v1457, 96
  %v1838 = vpop.permute.xlu0 %1837
  %1839 = vrot.lane.b32.xlu0 %v1458, 96
  %v1840 = vpop.permute.xlu0 %1839
  %1841 = vrot.lane.b32.xlu0 %v1459, 96
  %v1842 = vpop.permute.xlu0 %1841
  %1843 = vrot.lane.b32.xlu0 %v1460, 96
  %v1844 = vpop.permute.xlu0 %1843
  %v1861 = vsel %vm115, %v1332, %v1494
  %v1862 = vsel %vm115, %v1333, %v1496
  %v1863 = vsel %vm115, %v1334, %v1498
  %v1864 = vsel %vm115, %v1335, %v1500
  %v1865 = vsel %vm115, %v1336, %v1502
  %v1866 = vsel %vm115, %v1337, %v1504
  %v1867 = vsel %vm115, %v1338, %v1506
  %v1868 = vsel %vm115, %v1339, %v1508
  %v1869 = vsel %vm115, %v1340, %v1510
  %v1870 = vsel %vm115, %v1341, %v1512
  %v1871 = vsel %vm115, %v1342, %v1514
  %v1872 = vsel %vm115, %v1343, %v1516
  %v1873 = vsel %vm115, %v1344, %v1518
  %v1874 = vsel %vm115, %v1345, %v1520
  %v1875 = vsel %vm115, %v1346, %v1522
  %v1876 = vsel %vm115, %v1347, %v1524
  %v1877 = vsel %vm964, %v1861, %v1558
  %v1878 = vsel %vm964, %v1862, %v1560
  %v1879 = vsel %vm964, %v1863, %v1562
  %v1880 = vsel %vm964, %v1864, %v1564
  %v1881 = vsel %vm964, %v1865, %v1566
  %v1882 = vsel %vm964, %v1866, %v1568
  %v1883 = vsel %vm964, %v1867, %v1570
  %v1884 = vsel %vm964, %v1868, %v1572
  %v1885 = vsel %vm964, %v1869, %v1574
  %v1886 = vsel %vm964, %v1870, %v1576
  %v1887 = vsel %vm964, %v1871, %v1578
  %v1888 = vsel %vm964, %v1872, %v1580
  %v1889 = vsel %vm964, %v1873, %v1582
  %v1890 = vsel %vm964, %v1874, %v1584
  %v1891 = vsel %vm964, %v1875, %v1586
  %v1892 = vsel %vm964, %v1876, %v1588
  %v1893 = vsel %vm998, %v1877, %v1622
  %v1894 = vsel %vm998, %v1878, %v1624
  %v1895 = vsel %vm998, %v1879, %v1626
  %v1896 = vsel %vm998, %v1880, %v1628
  %v1897 = vsel %vm998, %v1881, %v1630
  %v1898 = vsel %vm998, %v1882, %v1632
  %v1899 = vsel %vm998, %v1883, %v1634
  %v1900 = vsel %vm998, %v1884, %v1636
  %v1901 = vsel %vm998, %v1885, %v1638
  %v1902 = vsel %vm998, %v1886, %v1640
  %v1903 = vsel %vm998, %v1887, %v1642
  %v1904 = vsel %vm998, %v1888, %v1644
  %v1905 = vsel %vm998, %v1889, %v1646
  %v1906 = vsel %vm998, %v1890, %v1648
  %v1907 = vsel %vm998, %v1891, %v1650
  %v1908 = vsel %vm998, %v1892, %v1652
  %v1909 = vsel %vm115, %v1396, %v1686
  %v1910 = vsel %vm115, %v1397, %v1688
  %v1911 = vsel %vm115, %v1398, %v1690
  %v1912 = vsel %vm115, %v1399, %v1692
  %v1913 = vsel %vm115, %v1400, %v1694
  %v1914 = vsel %vm115, %v1401, %v1696
  %v1915 = vsel %vm115, %v1402, %v1698
  %v1916 = vsel %vm115, %v1403, %v1700
  %v1917 = vsel %vm115, %v1404, %v1702
  %v1918 = vsel %vm115, %v1405, %v1704
  %v1919 = vsel %vm115, %v1406, %v1706
  %v1920 = vsel %vm115, %v1407, %v1708
  %v1921 = vsel %vm115, %v1408, %v1710
  %v1922 = vsel %vm115, %v1409, %v1712
  %v1923 = vsel %vm115, %v1410, %v1714
  %v1924 = vsel %vm115, %v1411, %v1716
  %v1925 = vsel %vm964, %v1909, %v1750
  %v1926 = vsel %vm964, %v1910, %v1752
  %v1927 = vsel %vm964, %v1911, %v1754
  %v1928 = vsel %vm964, %v1912, %v1756
  %v1929 = vsel %vm964, %v1913, %v1758
  %v1930 = vsel %vm964, %v1914, %v1760
  %v1931 = vsel %vm964, %v1915, %v1762
  %v1932 = vsel %vm964, %v1916, %v1764
  %v1933 = vsel %vm964, %v1917, %v1766
  %v1934 = vsel %vm964, %v1918, %v1768
  %v1935 = vsel %vm964, %v1919, %v1770
  %v1936 = vsel %vm964, %v1920, %v1772
  %v1937 = vsel %vm964, %v1921, %v1774
  %v1938 = vsel %vm964, %v1922, %v1776
  %v1939 = vsel %vm964, %v1923, %v1778
  %v1940 = vsel %vm964, %v1924, %v1780
  %v1941 = vsel %vm998, %v1925, %v1814
  %v1942 = vsel %vm998, %v1926, %v1816
  %v1943 = vsel %vm998, %v1927, %v1818
  %v1944 = vsel %vm998, %v1928, %v1820
  %v1945 = vsel %vm998, %v1929, %v1822
  %v1946 = vsel %vm998, %v1930, %v1824
  %v1947 = vsel %vm998, %v1931, %v1826
  %v1948 = vsel %vm998, %v1932, %v1828
  %v1949 = vsel %vm998, %v1933, %v1830
  %v1950 = vsel %vm998, %v1934, %v1832
  %v1951 = vsel %vm998, %v1935, %v1834
  %v1952 = vsel %vm998, %v1936, %v1836
  %v1953 = vsel %vm998, %v1937, %v1838
  %v1954 = vsel %vm998, %v1938, %v1840
  %v1955 = vsel %vm998, %v1939, %v1842
  %v1956 = vsel %vm998, %v1940, %v1844
  %v1957 = vpack.c.bf16 %v1894, %v1893
  %v1958 = vpack.c.bf16 %v1942, %v1941
  %v1959 = vpack.c.bf16 %v1462, %v1461
  %v1960 = vpack.c.bf16 %v1896, %v1895
  %v1961 = vpack.c.bf16 %v1944, %v1943
  %v1962 = vpack.c.bf16 %v1464, %v1463
  %v1963 = vpack.c.bf16 %v1898, %v1897
  %v1964 = vpack.c.bf16 %v1946, %v1945
  %v1965 = vpack.c.bf16 %v1466, %v1465
  %v1966 = vpack.c.bf16 %v1900, %v1899
  %v1967 = vpack.c.bf16 %v1948, %v1947
  %v1968 = vpack.c.bf16 %v1468, %v1467
  %v1969 = vpack.c.bf16 %v1902, %v1901
  %v1970 = vpack.c.bf16 %v1950, %v1949
  %v1971 = vpack.c.bf16 %v1470, %v1469
  %v1972 = vpack.c.bf16 %v1904, %v1903
  %v1973 = vpack.c.bf16 %v1952, %v1951
  %v1974 = vpack.c.bf16 %v1472, %v1471
  %v1975 = vpack.c.bf16 %v1906, %v1905
  %v1976 = vpack.c.bf16 %v1954, %v1953
  %v1977 = vpack.c.bf16 %v1474, %v1473
  %v1978 = vpack.c.bf16 %v1908, %v1907
  %v1979 = vpack.c.bf16 %v1956, %v1955
  %v1980 = vpack.c.bf16 %v1476, %v1475
  %v1981 = vld [vmem:[%s5] sm:$0xf]
  %v1982 = vld [vmem:[%s5 + $0x4] sm:$0xf]
  %v1983 = vld [vmem:[%s5 + $0x8] sm:$0xf]
  %v1984 = vld [vmem:[%s5 + $0xc] sm:$0xf]
  %v1985 = vld [vmem:[%s5 + $0x10] sm:$0xf]
  %v1986 = vld [vmem:[%s5 + $0x14] sm:$0xf]
  %v1987 = vld [vmem:[%s5 + $0x18] sm:$0xf]
  %v1988 = vld [vmem:[%s5 + $0x1c] sm:$0xf]
  %v1989 = vld [vmem:[%s5 + $0x20] sm:$0xf]
  %v1990 = vld [vmem:[%s5 + $0x24] sm:$0xf]
  %v1991 = vld [vmem:[%s5 + $0x28] sm:$0xf]
  %v1992 = vld [vmem:[%s5 + $0x2c] sm:$0xf]
  %v1993 = vld [vmem:[%s5 + $0x30] sm:$0xf]
  %v1994 = vld [vmem:[%s5 + $0x34] sm:$0xf]
  %v1995 = vld [vmem:[%s5 + $0x38] sm:$0xf]
  %v1996 = vld [vmem:[%s5 + $0x3c] sm:$0xf]
  %v1997 = vld [vmem:[%s5 + $0x40] sm:$0xf]
  %v1998 = vld [vmem:[%s5 + $0x44] sm:$0xf]
  %v1999 = vld [vmem:[%s5 + $0x48] sm:$0xf]
  %v2000 = vld [vmem:[%s5 + $0x4c] sm:$0xf]
  %v2001 = vld [vmem:[%s5 + $0x50] sm:$0xf]
  %v2002 = vld [vmem:[%s5 + $0x54] sm:$0xf]
  %v2003 = vld [vmem:[%s5 + $0x58] sm:$0xf]
  %v2004 = vld [vmem:[%s5 + $0x5c] sm:$0xf]
  %v2005 = vld [vmem:[%s5 + $0x60] sm:$0xf]
  %v2006 = vld [vmem:[%s5 + $0x64] sm:$0xf]
  %v2007 = vld [vmem:[%s5 + $0x68] sm:$0xf]
  %v2008 = vld [vmem:[%s5 + $0x6c] sm:$0xf]
  %v2009 = vld [vmem:[%s5 + $0x70] sm:$0xf]
  %v2010 = vld [vmem:[%s5 + $0x74] sm:$0xf]
  %v2011 = vld [vmem:[%s5 + $0x78] sm:$0xf]
  %v2012 = vld [vmem:[%s5 + $0x7c] sm:$0xf]
  %v2013 = vld [vmem:[%s5 + $0x80] sm:$0xf]
  %v2014 = vld [vmem:[%s5 + $0x84] sm:$0xf]
  %v2015 = vld [vmem:[%s5 + $0x88] sm:$0xf]
  %v2016 = vld [vmem:[%s5 + $0x8c] sm:$0xf]
  %v2017 = vld [vmem:[%s6] sm:$0x1]
  %v2019 = vlaneseq
  %v2020 = vshrl.u32 %v2019, 7
  %v2021 = vsub.s32 0, %v2020
  %v2022 = vrot.slane %v2017, %v2021
  %v2060 = vunpack.c.l.b16 %v1981
  %v2061 = vunpack.c.l.b16 %v1982
  %v2062 = vunpack.c.l.b16 %v1983
  %v2063 = vunpack.c.l.b16 %v1984
  %v2064 = vunpack.c.l.b16 %v1985
  %v2065 = vunpack.c.l.b16 %v1986
  %v2066 = vunpack.c.l.b16 %v1987
  %v2067 = vunpack.c.l.b16 %v1988
  %v2068 = vunpack.c.l.b16 %v1989
  %v2069 = vunpack.c.l.b16 %v1990
  %v2070 = vunpack.c.l.b16 %v1991
  %v2071 = vunpack.c.l.b16 %v1992
  %v2072 = vunpack.c.l.b16 %v1993
  %v2073 = vunpack.c.l.b16 %v1994
  %v2074 = vunpack.c.l.b16 %v1995
  %v2075 = vunpack.c.l.b16 %v1996
  %v2076 = vunpack.c.l.b16 %v1997
  %v2077 = vunpack.c.l.b16 %v1998
  %v2078 = vunpack.c.l.b16 %v1999
  %v2079 = vunpack.c.l.b16 %v2000
  %v2080 = vunpack.c.l.b16 %v2001
  %v2081 = vunpack.c.l.b16 %v2002
  %v2082 = vunpack.c.l.b16 %v2003
  %v2083 = vunpack.c.l.b16 %v2004
  %v2084 = vunpack.c.l.b16 %v2005
  %v2085 = vunpack.c.l.b16 %v2006
  %v2086 = vunpack.c.l.b16 %v2007
  %v2087 = vunpack.c.l.b16 %v2008
  %v2088 = vunpack.c.l.b16 %v2009
  %v2089 = vunpack.c.l.b16 %v2010
  %v2090 = vunpack.c.l.b16 %v2011
  %v2091 = vunpack.c.l.b16 %v2012
  %v2092 = vunpack.c.l.b16 %v2013
  %v2093 = vunpack.c.l.b16 %v2014
  %v2094 = vunpack.c.l.b16 %v2015
  %v2095 = vunpack.c.l.b16 %v2016
  %v2096 = vpack.c.b16 %v2061, %v2060
  %v2097 = vpack.c.b16 %v2063, %v2062
  %v2098 = vpack.c.b16 %v2065, %v2064
  %v2099 = vpack.c.b16 %v2067, %v2066
  %v2100 = vpack.c.b16 %v2069, %v2068
  %v2101 = vpack.c.b16 %v2071, %v2070
  %v2102 = vpack.c.b16 %v2073, %v2072
  %v2103 = vpack.c.b16 %v2075, %v2074
  %v2104 = vpack.c.b16 %v2077, %v2076
  %v2105 = vpack.c.b16 %v2079, %v2078
  %v2106 = vpack.c.b16 %v2081, %v2080
  %v2107 = vpack.c.b16 %v2083, %v2082
  %v2108 = vpack.c.b16 %v2085, %v2084
  %v2109 = vpack.c.b16 %v2087, %v2086
  %v2110 = vpack.c.b16 %v2089, %v2088
  %v2111 = vpack.c.b16 %v2091, %v2090
  %v2112 = vpack.c.b16 %v2093, %v2092
  %v2113 = vpack.c.b16 %v2095, %v2094
  %v2133 = vsel %vm115, %v1959, 0
  %v2136 = vsel %vm115, %v1962, 0
  %v2139 = vsel %vm115, %v1965, 0
  %v2142 = vsel %vm115, %v1968, 0
  %v2145 = vsel %vm115, %v1971, 0
  %v2148 = vsel %vm115, %v1974, 0
  %v2151 = vsel %vm115, %v1977, 0
  %v2154 = vsel %vm115, %v1980, 0
  %2156 = vmatprep.subr.bf16.mxu0 0
  %2157 = vmatpush1.bf16.msra.mxu0 %v2103
  %2158 = vmatprep.subr.bf16.mxu0 0
  %2159 = vmatpush1.bf16.msra.mxu0 %v2102
  %2160 = vmatprep.subr.bf16.mxu0 0
  %2161 = vmatpush1.bf16.msra.mxu0 %v2101
  %2162 = vmatprep.subr.bf16.mxu0 0
  %2163 = vmatpush1.bf16.msra.mxu0 %v2100
  %2164 = vmatprep.subr.bf16.mxu0 0
  %2165 = vmatpush1.bf16.msra.mxu0 %v2099
  %2166 = vmatprep.subr.bf16.mxu0 0
  %2167 = vmatpush1.bf16.msra.mxu0 %v2098
  %2168 = vmatprep.subr.bf16.mxu0 0
  %2169 = vmatpush1.bf16.msra.mxu0 %v2097
  %2170 = vmatprep.subr.bf16.mxu0 0
  %2171 = vmatpush1.bf16.msra.mxu0 %v2096
  %2172 = vmatprep.subr.bf16.mxu0 0
  %2173 = vmatpush2.bf16.msra.mxu0 %v2111
  %2174 = vmatprep.subr.bf16.mxu0 0
  %2175 = vmatpush2.bf16.msra.mxu0 %v2110
  %2176 = vmatprep.subr.bf16.mxu0 0
  %2177 = vmatpush2.bf16.msra.mxu0 %v2109
  %2178 = vmatprep.subr.bf16.mxu0 0
  %2179 = vmatpush2.bf16.msra.mxu0 %v2108
  %2180 = vmatprep.subr.bf16.mxu0 0
  %2181 = vmatpush2.bf16.msra.mxu0 %v2107
  %2182 = vmatprep.subr.bf16.mxu0 0
  %2183 = vmatpush2.bf16.msra.mxu0 %v2106
  %2184 = vmatprep.subr.bf16.mxu0 0
  %2185 = vmatpush2.bf16.msra.mxu0 %v2105
  %2186 = vmatprep.subr.bf16.mxu0 0
  %2187 = vmatpush2.bf16.msra.mxu0 %v2104
  %2188 = vmatprep.mubr.bf16.mxu0 %v1958
  %2189 = vmatmul.mubr.bf16.gmra.mxu0 %v1957
  %v2190 = vpop.f32.mrf.mxu0
  %v2191 = vadd.f32 %v2022, %v2190
  %v2192 = vpop.f32.mrf.mxu0
  %v2193 = vpop.f32.mrf.mxu0
  %v2194 = vadd.f32 %v2022, %v2193
  %v2195 = vpop.f32.mrf.mxu0
  %2196 = vmatprep.mubr.bf16.mxu0 %v1961
  %2197 = vmatmul.mubr.bf16.gmra.mxu0 %v1960
  %v2198 = vpop.f32.mrf.mxu0
  %v2199 = vadd.f32 %v2022, %v2198
  %v2200 = vpop.f32.mrf.mxu0
  %v2201 = vpop.f32.mrf.mxu0
  %v2202 = vadd.f32 %v2022, %v2201
  %v2203 = vpop.f32.mrf.mxu0
  %2204 = vmatprep.mubr.bf16.mxu0 %v1964
  %2205 = vmatmul.mubr.bf16.gmra.mxu0 %v1963
  %v2206 = vpop.f32.mrf.mxu0
  %v2207 = vadd.f32 %v2022, %v2206
  %v2208 = vpop.f32.mrf.mxu0
  %v2209 = vpop.f32.mrf.mxu0
  %v2210 = vadd.f32 %v2022, %v2209
  %v2211 = vpop.f32.mrf.mxu0
  %2212 = vmatprep.mubr.bf16.mxu0 %v1967
  %2213 = vmatmul.mubr.bf16.gmra.mxu0 %v1966
  %v2214 = vpop.f32.mrf.mxu0
  %v2215 = vadd.f32 %v2022, %v2214
  %v2216 = vpop.f32.mrf.mxu0
  %v2217 = vpop.f32.mrf.mxu0
  %v2218 = vadd.f32 %v2022, %v2217
  %v2219 = vpop.f32.mrf.mxu0
  %2220 = vmatprep.mubr.bf16.mxu0 %v1970
  %2221 = vmatmul.mubr.bf16.gmra.mxu0 %v1969
  %v2222 = vpop.f32.mrf.mxu0
  %v2223 = vadd.f32 %v2022, %v2222
  %v2224 = vpop.f32.mrf.mxu0
  %v2225 = vpop.f32.mrf.mxu0
  %v2226 = vadd.f32 %v2022, %v2225
  %v2227 = vpop.f32.mrf.mxu0
  %2228 = vmatprep.mubr.bf16.mxu0 %v1973
  %2229 = vmatmul.mubr.bf16.gmra.mxu0 %v1972
  %v2230 = vpop.f32.mrf.mxu0
  %v2231 = vadd.f32 %v2022, %v2230
  %v2232 = vpop.f32.mrf.mxu0
  %v2233 = vpop.f32.mrf.mxu0
  %v2234 = vadd.f32 %v2022, %v2233
  %v2235 = vpop.f32.mrf.mxu0
  %2236 = vmatprep.mubr.bf16.mxu0 %v1976
  %2237 = vmatmul.mubr.bf16.gmra.mxu0 %v1975
  %v2238 = vpop.f32.mrf.mxu0
  %v2239 = vadd.f32 %v2022, %v2238
  %v2240 = vpop.f32.mrf.mxu0
  %v2241 = vpop.f32.mrf.mxu0
  %v2242 = vadd.f32 %v2022, %v2241
  %v2243 = vpop.f32.mrf.mxu0
  %2244 = vmatprep.mubr.bf16.mxu0 %v1979
  %2245 = vmatmul.mubr.bf16.gmra.mxu0 %v1978
  %v2246 = vpop.f32.mrf.mxu0
  %v2247 = vadd.f32 %v2022, %v2246
  %v2248 = vpop.f32.mrf.mxu0
  %v2249 = vpop.f32.mrf.mxu0
  %v2250 = vadd.f32 %v2022, %v2249
  %v2251 = vpop.f32.mrf.mxu0
  %2252 = vdwg.mxu0
  %2253 = vmatprep.subr.bf16.mxu0 0
  %2254 = vmatpush1.bf16.msra.mxu0 0
  %2255 = vmatprep.subr.bf16.mxu0 0
  %2256 = vmatpush1.bf16.msra.mxu0 0
  %2257 = vmatprep.subr.bf16.mxu0 0
  %2258 = vmatpush1.bf16.msra.mxu0 0
  %2259 = vmatprep.subr.bf16.mxu0 0
  %2260 = vmatpush1.bf16.msra.mxu0 0
  %2261 = vmatprep.subr.bf16.mxu0 0
  %2262 = vmatpush1.bf16.msra.mxu0 0
  %2263 = vmatprep.subr.bf16.mxu0 0
  %2264 = vmatpush1.bf16.msra.mxu0 0
  %2265 = vmatprep.subr.bf16.mxu0 0
  %2266 = vmatpush1.bf16.msra.mxu0 %v2113
  %2267 = vmatprep.subr.bf16.mxu0 0
  %2268 = vmatpush1.bf16.msra.mxu0 %v2112
  %2269 = vmatprep.subr.bf16.mxu0 0
  %2270 = vmatpush2.bf16.msra.mxu0 0
  %2271 = vmatprep.subr.bf16.mxu0 0
  %2272 = vmatpush2.bf16.msra.mxu0 0
  %2273 = vmatprep.subr.bf16.mxu0 0
  %2274 = vmatpush2.bf16.msra.mxu0 0
  %2275 = vmatprep.subr.bf16.mxu0 0
  %2276 = vmatpush2.bf16.msra.mxu0 0
  %2277 = vmatprep.subr.bf16.mxu0 0
  %2278 = vmatpush2.bf16.msra.mxu0 0
  %2279 = vmatprep.subr.bf16.mxu0 0
  %2280 = vmatpush2.bf16.msra.mxu0 0
  %2281 = vmatprep.subr.bf16.mxu0 0
  %2282 = vmatpush2.bf16.msra.mxu0 0
  %2283 = vmatprep.subr.bf16.mxu0 0
  %2284 = vmatpush2.bf16.msra.mxu0 0
  %2285 = vmatprep.mubr.bf16.mxu0 0
  %2286 = vmatmul.mubr.bf16.gmra.mxu0 %v2133
  %v2287 = vpop.f32.mrf.mxu0
  %v2288 = vadd.f32 %v2191, %v2287
  %v2289 = vpop.f32.mrf.mxu0
  %v2290 = vpop.f32.mrf.mxu0
  %v2291 = vadd.f32 %v2194, %v2290
  %v2292 = vpop.f32.mrf.mxu0
  %2293 = vmatprep.mubr.bf16.mxu0 0
  %2294 = vmatmul.mubr.bf16.gmra.mxu0 %v2136
  %v2295 = vpop.f32.mrf.mxu0
  %v2296 = vadd.f32 %v2199, %v2295
  %v2297 = vpop.f32.mrf.mxu0
  %v2298 = vpop.f32.mrf.mxu0
  %v2299 = vadd.f32 %v2202, %v2298
  %v2300 = vpop.f32.mrf.mxu0
  %2301 = vmatprep.mubr.bf16.mxu0 0
  %2302 = vmatmul.mubr.bf16.gmra.mxu0 %v2139
  %v2303 = vpop.f32.mrf.mxu0
  %v2304 = vadd.f32 %v2207, %v2303
  %v2305 = vpop.f32.mrf.mxu0
  %v2306 = vpop.f32.mrf.mxu0
  %v2307 = vadd.f32 %v2210, %v2306
  %v2308 = vpop.f32.mrf.mxu0
  %2309 = vmatprep.mubr.bf16.mxu0 0
  %2310 = vmatmul.mubr.bf16.gmra.mxu0 %v2142
  %v2311 = vpop.f32.mrf.mxu0
  %v2312 = vadd.f32 %v2215, %v2311
  %v2313 = vpop.f32.mrf.mxu0
  %v2314 = vpop.f32.mrf.mxu0
  %v2315 = vadd.f32 %v2218, %v2314
  %v2316 = vpop.f32.mrf.mxu0
  %2317 = vmatprep.mubr.bf16.mxu0 0
  %2318 = vmatmul.mubr.bf16.gmra.mxu0 %v2145
  %v2319 = vpop.f32.mrf.mxu0
  %v2320 = vadd.f32 %v2223, %v2319
  %v2321 = vpop.f32.mrf.mxu0
  %v2322 = vpop.f32.mrf.mxu0
  %v2323 = vadd.f32 %v2226, %v2322
  %v2324 = vpop.f32.mrf.mxu0
  %2325 = vmatprep.mubr.bf16.mxu0 0
  %2326 = vmatmul.mubr.bf16.gmra.mxu0 %v2148
  %v2327 = vpop.f32.mrf.mxu0
  %v2328 = vadd.f32 %v2231, %v2327
  %v2329 = vpop.f32.mrf.mxu0
  %v2330 = vpop.f32.mrf.mxu0
  %v2331 = vadd.f32 %v2234, %v2330
  %v2332 = vpop.f32.mrf.mxu0
  %2333 = vmatprep.mubr.bf16.mxu0 0
  %2334 = vmatmul.mubr.bf16.gmra.mxu0 %v2151
  %v2335 = vpop.f32.mrf.mxu0
  %v2336 = vadd.f32 %v2239, %v2335
  %v2337 = vpop.f32.mrf.mxu0
  %v2338 = vpop.f32.mrf.mxu0
  %v2339 = vadd.f32 %v2242, %v2338
  %v2340 = vpop.f32.mrf.mxu0
  %2341 = vmatprep.mubr.bf16.mxu0 0
  %2342 = vmatmul.mubr.bf16.gmra.mxu0 %v2154
  %v2343 = vpop.f32.mrf.mxu0
  %v2344 = vadd.f32 %v2247, %v2343
  %v2345 = vpop.f32.mrf.mxu0
  %v2346 = vpop.f32.mrf.mxu0
  %v2347 = vadd.f32 %v2250, %v2346
  %v2348 = vpop.f32.mrf.mxu0
  %2349 = vdwg.mxu0
  %v2350 = vmax.f32 %v2288, 0.0
  %v2351 = vmax.f32 %v2291, 0.0
  %v2352 = vmax.f32 %v2296, 0.0
  %v2353 = vmax.f32 %v2299, 0.0
  %v2354 = vmax.f32 %v2304, 0.0
  %v2355 = vmax.f32 %v2307, 0.0
  %v2356 = vmax.f32 %v2312, 0.0
  %v2357 = vmax.f32 %v2315, 0.0
  %v2358 = vmax.f32 %v2320, 0.0
  %v2359 = vmax.f32 %v2323, 0.0
  %v2360 = vmax.f32 %v2328, 0.0
  %v2361 = vmax.f32 %v2331, 0.0
  %v2362 = vmax.f32 %v2336, 0.0
  %v2363 = vmax.f32 %v2339, 0.0
  %v2364 = vmax.f32 %v2344, 0.0
  %v2365 = vmax.f32 %v2347, 0.0
  %v2366 = vpack.c.bf16 %v2351, %v2350
  %v2367 = vpack.c.bf16 %v2353, %v2352
  %v2368 = vpack.c.bf16 %v2355, %v2354
  %v2369 = vpack.c.bf16 %v2357, %v2356
  %v2370 = vpack.c.bf16 %v2359, %v2358
  %v2371 = vpack.c.bf16 %v2361, %v2360
  %v2372 = vpack.c.bf16 %v2363, %v2362
  %v2373 = vpack.c.bf16 %v2365, %v2364
  %v2374 = vld [vmem:[%s7] sm:$0xf]
  %v2375 = vld [vmem:[%s7 + $0x4] sm:$0xf]
  %v2376 = vld [vmem:[%s7 + $0x8] sm:$0xf]
  %v2377 = vld [vmem:[%s7 + $0xc] sm:$0xf]
  %v2378 = vld [vmem:[%s8] sm:$0x1]
  %v2380 = vlaneseq
  %v2381 = vshrl.u32 %v2380, 7
  %v2382 = vsub.s32 0, %v2381
  %v2383 = vrot.slane %v2378, %v2382
  %v2389 = vunpack.c.l.b16 %v2374
  %v2390 = vunpack.c.l.b16 %v2375
  %v2391 = vunpack.c.l.b16 %v2376
  %v2392 = vunpack.c.l.b16 %v2377
  %v2393 = vpack.c.b16 %v2390, %v2389
  %v2394 = vpack.c.b16 %v2392, %v2391
  %v2398 = vsel %vm115, %v2366, 0
  %v2401 = vsel %vm115, %v2367, 0
  %v2404 = vsel %vm115, %v2368, 0
  %v2407 = vsel %vm115, %v2369, 0
  %v2410 = vsel %vm115, %v2370, 0
  %v2413 = vsel %vm115, %v2371, 0
  %v2416 = vsel %vm115, %v2372, 0
  %v2419 = vsel %vm115, %v2373, 0
  %2421 = vmatprep.subr.bf16.mxu0 0
  %2422 = vmatpush1.bf16.msra.mxu0 0
  %2423 = vmatprep.subr.bf16.mxu0 0
  %2424 = vmatpush1.bf16.msra.mxu0 0
  %2425 = vmatprep.subr.bf16.mxu0 0
  %2426 = vmatpush1.bf16.msra.mxu0 0
  %2427 = vmatprep.subr.bf16.mxu0 0
  %2428 = vmatpush1.bf16.msra.mxu0 0
  %2429 = vmatprep.subr.bf16.mxu0 0
  %2430 = vmatpush1.bf16.msra.mxu0 0
  %2431 = vmatprep.subr.bf16.mxu0 0
  %2432 = vmatpush1.bf16.msra.mxu0 0
  %2433 = vmatprep.subr.bf16.mxu0 0
  %2434 = vmatpush1.bf16.msra.mxu0 %v2394
  %2435 = vmatprep.subr.bf16.mxu0 0
  %2436 = vmatpush1.bf16.msra.mxu0 %v2393
  %2437 = vmatprep.subr.bf16.mxu0 0
  %2438 = vmatpush2.bf16.msra.mxu0 0
  %2439 = vmatprep.subr.bf16.mxu0 0
  %2440 = vmatpush2.bf16.msra.mxu0 0
  %2441 = vmatprep.subr.bf16.mxu0 0
  %2442 = vmatpush2.bf16.msra.mxu0 0
  %2443 = vmatprep.subr.bf16.mxu0 0
  %2444 = vmatpush2.bf16.msra.mxu0 0
  %2445 = vmatprep.subr.bf16.mxu0 0
  %2446 = vmatpush2.bf16.msra.mxu0 0
  %2447 = vmatprep.subr.bf16.mxu0 0
  %2448 = vmatpush2.bf16.msra.mxu0 0
  %2449 = vmatprep.subr.bf16.mxu0 0
  %2450 = vmatpush2.bf16.msra.mxu0 0
  %2451 = vmatprep.subr.bf16.mxu0 0
  %2452 = vmatpush2.bf16.msra.mxu0 0
  %2453 = vmatprep.mubr.bf16.mxu0 0
  %2454 = vmatmul.mubr.bf16.gmra.mxu0 %v2398
  %v2455 = vpop.f32.mrf.mxu0
  %v2456 = vadd.f32 %v2383, %v2455
  %v2457 = vpop.f32.mrf.mxu0
  %v2458 = vpop.f32.mrf.mxu0
  %v2459 = vadd.f32 %v2383, %v2458
  %v2460 = vpop.f32.mrf.mxu0
  %2461 = vmatprep.mubr.bf16.mxu0 0
  %2462 = vmatmul.mubr.bf16.gmra.mxu0 %v2401
  %v2463 = vpop.f32.mrf.mxu0
  %v2464 = vadd.f32 %v2383, %v2463
  %v2465 = vpop.f32.mrf.mxu0
  %v2466 = vpop.f32.mrf.mxu0
  %v2467 = vadd.f32 %v2383, %v2466
  %v2468 = vpop.f32.mrf.mxu0
  %2469 = vmatprep.mubr.bf16.mxu0 0
  %2470 = vmatmul.mubr.bf16.gmra.mxu0 %v2404
  %v2471 = vpop.f32.mrf.mxu0
  %v2472 = vadd.f32 %v2383, %v2471
  %v2473 = vpop.f32.mrf.mxu0
  %v2474 = vpop.f32.mrf.mxu0
  %v2475 = vadd.f32 %v2383, %v2474
  %v2476 = vpop.f32.mrf.mxu0
  %2477 = vmatprep.mubr.bf16.mxu0 0
  %2478 = vmatmul.mubr.bf16.gmra.mxu0 %v2407
  %v2479 = vpop.f32.mrf.mxu0
  %v2480 = vadd.f32 %v2383, %v2479
  %v2481 = vpop.f32.mrf.mxu0
  %v2482 = vpop.f32.mrf.mxu0
  %v2483 = vadd.f32 %v2383, %v2482
  %v2484 = vpop.f32.mrf.mxu0
  %2485 = vmatprep.mubr.bf16.mxu0 0
  %2486 = vmatmul.mubr.bf16.gmra.mxu0 %v2410
  %v2487 = vpop.f32.mrf.mxu0
  %v2488 = vadd.f32 %v2383, %v2487
  %v2489 = vpop.f32.mrf.mxu0
  %v2490 = vpop.f32.mrf.mxu0
  %v2491 = vadd.f32 %v2383, %v2490
  %v2492 = vpop.f32.mrf.mxu0
  %2493 = vmatprep.mubr.bf16.mxu0 0
  %2494 = vmatmul.mubr.bf16.gmra.mxu0 %v2413
  %v2495 = vpop.f32.mrf.mxu0
  %v2496 = vadd.f32 %v2383, %v2495
  %v2497 = vpop.f32.mrf.mxu0
  %v2498 = vpop.f32.mrf.mxu0
  %v2499 = vadd.f32 %v2383, %v2498
  %v2500 = vpop.f32.mrf.mxu0
  %2501 = vmatprep.mubr.bf16.mxu0 0
  %2502 = vmatmul.mubr.bf16.gmra.mxu0 %v2416
  %v2503 = vpop.f32.mrf.mxu0
  %v2504 = vadd.f32 %v2383, %v2503
  %v2505 = vpop.f32.mrf.mxu0
  %v2506 = vpop.f32.mrf.mxu0
  %v2507 = vadd.f32 %v2383, %v2506
  %v2508 = vpop.f32.mrf.mxu0
  %2509 = vmatprep.mubr.bf16.mxu0 0
  %2510 = vmatmul.mubr.bf16.gmra.mxu0 %v2419
  %v2511 = vpop.f32.mrf.mxu0
  %v2512 = vadd.f32 %v2383, %v2511
  %v2513 = vpop.f32.mrf.mxu0
  %v2514 = vpop.f32.mrf.mxu0
  %v2515 = vadd.f32 %v2383, %v2514
  %v2516 = vpop.f32.mrf.mxu0
  %2517 = vdwg.mxu0
  %v2518 = vld [vmem:[%s9] sm:$0xff]
  %v2519 = vld [vmem:[%s9 + $0x8] sm:$0xff]
  %v2520 = vld [vmem:[%s9 + $0x10] sm:$0xff]
  %v2521 = vld [vmem:[%s9 + $0x18] sm:$0xff]
  %v2522 = vld [vmem:[%s9 + $0x20] sm:$0xff]
  %v2523 = vld [vmem:[%s9 + $0x28] sm:$0xff]
  %v2524 = vld [vmem:[%s9 + $0x30] sm:$0xff]
  %v2525 = vld [vmem:[%s9 + $0x38] sm:$0xff]
  %2526 = vxpose.xlu0.b32.start [1/16] %v2456, 128
  %2527 = vxpose.xlu0.b32.cont [2/16] %v2459, 128
  %2528 = vxpose.xlu0.b32.cont [3/16] %v2464, 128
  %2529 = vxpose.xlu0.b32.cont [4/16] %v2467, 128
  %2530 = vxpose.xlu0.b32.cont [5/16] %v2472, 128
  %2531 = vxpose.xlu0.b32.cont [6/16] %v2475, 128
  %2532 = vxpose.xlu0.b32.cont [7/16] %v2480, 128
  %2533 = vxpose.xlu0.b32.cont [8/16] %v2483, 128
  %2534 = vxpose.xlu0.b32.cont [9/16] 0.0, 128
  %2535 = vxpose.xlu0.b32.cont [10/16] 0.0, 128
  %2536 = vxpose.xlu0.b32.cont [11/16] 0.0, 128
  %2537 = vxpose.xlu0.b32.cont [12/16] 0.0, 128
  %2538 = vxpose.xlu0.b32.cont [13/16] 0.0, 128
  %2539 = vxpose.xlu0.b32.cont [14/16] 0.0, 128
  %2540 = vxpose.xlu0.b32.cont [15/16] 0.0, 128
  %2541 = vxpose.xlu0.b32.end [16/16] 0.0, 128
  %v2542 = vpop.trf.xlu0
  %v2543 = vpop.trf.xlu0
  %v2544 = vpop.trf.xlu0
  %v2545 = vpop.trf.xlu0
  %v2546 = vpop.trf.xlu0
  %v2547 = vpop.trf.xlu0
  %v2548 = vpop.trf.xlu0
  %v2549 = vpop.trf.xlu0
  %v2550 = vpop.trf.xlu0
  %v2551 = vpop.trf.xlu0
  %v2552 = vpop.trf.xlu0
  %v2553 = vpop.trf.xlu0
  %v2554 = vpop.trf.xlu0
  %v2555 = vpop.trf.xlu0
  %v2556 = vpop.trf.xlu0
  %v2557 = vpop.trf.xlu0
  %v2558 = vpack.c.bf16 %v2542, %v2542
  %v2567 = vunpack.c.l.b16 %v2518
  %v2568 = vunpack.c.h.b16 %v2518
  %v2569 = vunpack.c.l.b16 %v2519
  %v2570 = vunpack.c.h.b16 %v2519
  %v2571 = vunpack.c.l.b16 %v2520
  %v2572 = vunpack.c.h.b16 %v2520
  %v2573 = vunpack.c.l.b16 %v2521
  %v2574 = vunpack.c.h.b16 %v2521
  %v2575 = vunpack.c.l.b16 %v2522
  %v2576 = vunpack.c.h.b16 %v2522
  %v2577 = vunpack.c.l.b16 %v2523
  %v2578 = vunpack.c.h.b16 %v2523
  %v2579 = vunpack.c.l.b16 %v2524
  %v2580 = vunpack.c.h.b16 %v2524
  %v2581 = vunpack.c.l.b16 %v2525
  %v2582 = vunpack.c.h.b16 %v2525
  %v2583 = vpack.c.b16 %v2569, %v2567
  %v2584 = vpack.c.b16 %v2570, %v2568
  %v2585 = vpack.c.b16 %v2573, %v2571
  %v2586 = vpack.c.b16 %v2574, %v2572
  %v2587 = vpack.c.b16 %v2577, %v2575
  %v2588 = vpack.c.b16 %v2578, %v2576
  %v2589 = vpack.c.b16 %v2581, %v2579
  %v2590 = vpack.c.b16 %v2582, %v2580
  %v2600 = vsel %vm964, %v2558, 0
  %2602 = vmatprep.subr.bf16.mxu0 0
  %2603 = vmatpush1.bf16.msra.mxu0 0
  %2604 = vmatprep.subr.bf16.mxu0 0
  %2605 = vmatpush1.bf16.msra.mxu0 0
  %2606 = vmatprep.subr.bf16.mxu0 0
  %2607 = vmatpush1.bf16.msra.mxu0 0
  %2608 = vmatprep.subr.bf16.mxu0 0
  %2609 = vmatpush1.bf16.msra.mxu0 0
  %2610 = vmatprep.subr.bf16.mxu0 %v2590
  %2611 = vmatpush1.bf16.msra.mxu0 %v2589
  %2612 = vmatprep.subr.bf16.mxu0 %v2588
  %2613 = vmatpush1.bf16.msra.mxu0 %v2587
  %2614 = vmatprep.subr.bf16.mxu0 %v2586
  %2615 = vmatpush1.bf16.msra.mxu0 %v2585
  %2616 = vmatprep.subr.bf16.mxu0 %v2584
  %2617 = vmatpush1.bf16.msra.mxu0 %v2583
  %2618 = vmatprep.subr.bf16.mxu0 0
  %2619 = vmatpush2.bf16.msra.mxu0 0
  %2620 = vmatprep.subr.bf16.mxu0 0
  %2621 = vmatpush2.bf16.msra.mxu0 0
  %2622 = vmatprep.subr.bf16.mxu0 0
  %2623 = vmatpush2.bf16.msra.mxu0 0
  %2624 = vmatprep.subr.bf16.mxu0 0
  %2625 = vmatpush2.bf16.msra.mxu0 0
  %2626 = vmatprep.subr.bf16.mxu0 0
  %2627 = vmatpush2.bf16.msra.mxu0 0
  %2628 = vmatprep.subr.bf16.mxu0 0
  %2629 = vmatpush2.bf16.msra.mxu0 0
  %2630 = vmatprep.subr.bf16.mxu0 0
  %2631 = vmatpush2.bf16.msra.mxu0 0
  %2632 = vmatprep.subr.bf16.mxu0 0
  %2633 = vmatpush2.bf16.msra.mxu0 0
  %2634 = vmatprep.mubr.bf16.mxu0 0
  %2635 = vmatmul.mubr.bf16.gmra.mxu0 %v2600
  %v2636 = vpop.f32.mrf.mxu0
  %v2637 = vadd.f32 0.0, %v2636
  %v2638 = vpop.f32.mrf.mxu0
  %v2639 = vadd.f32 0.0, %v2638
  %v2640 = vpop.f32.mrf.mxu0
  %v2641 = vpop.f32.mrf.mxu0
  %2642 = vdwg.mxu0
  %2643 = vst [vmem:[%s10] sm:$0xff] %v2637
  %2644 = vst [vmem:[%s10 + $0x8] sm:$0xff] %v2639
  %2645 = vxpose.xlu0.b32.start [1/16] %v2488, 128
  %2646 = vxpose.xlu0.b32.cont [2/16] %v2491, 128
  %2647 = vxpose.xlu0.b32.cont [3/16] %v2496, 128
  %2648 = vxpose.xlu0.b32.cont [4/16] %v2499, 128
  %2649 = vxpose.xlu0.b32.cont [5/16] %v2504, 128
  %2650 = vxpose.xlu0.b32.cont [6/16] %v2507, 128
  %2651 = vxpose.xlu0.b32.cont [7/16] %v2512, 128
  %2652 = vxpose.xlu0.b32.cont [8/16] %v2515, 128
  %2653 = vxpose.xlu0.b32.cont [9/16] 0.0, 128
  %2654 = vxpose.xlu0.b32.cont [10/16] 0.0, 128
  %2655 = vxpose.xlu0.b32.cont [11/16] 0.0, 128
  %2656 = vxpose.xlu0.b32.cont [12/16] 0.0, 128
  %2657 = vxpose.xlu0.b32.cont [13/16] 0.0, 128
  %2658 = vxpose.xlu0.b32.cont [14/16] 0.0, 128
  %2659 = vxpose.xlu0.b32.cont [15/16] 0.0, 128
  %2660 = vxpose.xlu0.b32.end [16/16] 0.0, 128
  %v2661 = vpop.trf.xlu0
  %v2662 = vpop.trf.xlu0
  %v2663 = vpop.trf.xlu0
  %v2664 = vpop.trf.xlu0
  %v2665 = vpop.trf.xlu0
  %v2666 = vpop.trf.xlu0
  %v2667 = vpop.trf.xlu0
  %v2668 = vpop.trf.xlu0
  %v2669 = vpop.trf.xlu0
  %v2670 = vpop.trf.xlu0
  %v2671 = vpop.trf.xlu0
  %v2672 = vpop.trf.xlu0
  %v2673 = vpop.trf.xlu0
  %v2674 = vpop.trf.xlu0
  %v2675 = vpop.trf.xlu0
  %v2676 = vpop.trf.xlu0
  %v2677 = vpack.c.bf16 %v2661, %v2661
  %v2679 = vsel %vm964, %v2677, 0
  %2681 = vmatprep.subr.bf16.mxu0 0
  %2682 = vmatpush1.bf16.msra.mxu0 0
  %2683 = vmatprep.subr.bf16.mxu0 0
  %2684 = vmatpush1.bf16.msra.mxu0 0
  %2685 = vmatprep.subr.bf16.mxu0 0
  %2686 = vmatpush1.bf16.msra.mxu0 0
  %2687 = vmatprep.subr.bf16.mxu0 0
  %2688 = vmatpush1.bf16.msra.mxu0 0
  %2689 = vmatprep.subr.bf16.mxu0 %v2590
  %2690 = vmatpush1.bf16.msra.mxu0 %v2589
  %2691 = vmatprep.subr.bf16.mxu0 %v2588
  %2692 = vmatpush1.bf16.msra.mxu0 %v2587
  %2693 = vmatprep.subr.bf16.mxu0 %v2586
  %2694 = vmatpush1.bf16.msra.mxu0 %v2585
  %2695 = vmatprep.subr.bf16.mxu0 %v2584
  %2696 = vmatpush1.bf16.msra.mxu0 %v2583
  %2697 = vmatprep.subr.bf16.mxu0 0
  %2698 = vmatpush2.bf16.msra.mxu0 0
  %2699 = vmatprep.subr.bf16.mxu0 0
  %2700 = vmatpush2.bf16.msra.mxu0 0
  %2701 = vmatprep.subr.bf16.mxu0 0
  %2702 = vmatpush2.bf16.msra.mxu0 0
  %2703 = vmatprep.subr.bf16.mxu0 0
  %2704 = vmatpush2.bf16.msra.mxu0 0
  %2705 = vmatprep.subr.bf16.mxu0 0
  %2706 = vmatpush2.bf16.msra.mxu0 0
  %2707 = vmatprep.subr.bf16.mxu0 0
  %2708 = vmatpush2.bf16.msra.mxu0 0
  %2709 = vmatprep.subr.bf16.mxu0 0
  %2710 = vmatpush2.bf16.msra.mxu0 0
  %2711 = vmatprep.subr.bf16.mxu0 0
  %2712 = vmatpush2.bf16.msra.mxu0 0
  %2713 = vmatprep.mubr.bf16.mxu0 0
  %2714 = vmatmul.mubr.bf16.gmra.mxu0 %v2679
  %v2715 = vpop.f32.mrf.mxu0
  %v2716 = vadd.f32 0.0, %v2715
  %v2717 = vpop.f32.mrf.mxu0
  %v2718 = vadd.f32 0.0, %v2717
  %v2719 = vpop.f32.mrf.mxu0
  %v2720 = vpop.f32.mrf.mxu0
  %2721 = vdwg.mxu0
  %s2722 = scalar_lea.vmem %s10, 16
  %2723 = vst [vmem:[%s2722] sm:$0xff] %v2716
  %2724 = vst [vmem:[%s2722 + $0x8] sm:$0xff] %v2718
  // Predicated region
  $region42: #{fcn_wrapper_forward.1} parent=0 // pred_check
    _
  $region43: #{fcn_wrapper_forward.1} parent=0 // pred_check_branch
    %2726 = sbr.rel (0) target = $region45
  $region44: #{fcn_wrapper_forward.1} parent=0 // pred_region
    _
  $region45: #{fcn_wrapper_forward.1} parent=0 // pred_fallthru
    _
  // Predicated region
  $region46: #{fcn_wrapper_forward.1} parent=0 // pred_check
    _
  $region47: #{fcn_wrapper_forward.1} parent=0 // pred_check_branch
    %2728 = sbr.rel (0) target = $region49
  $region48: #{fcn_wrapper_forward.1} parent=0 // pred_region
    _
  $region49: #{fcn_wrapper_forward.1} parent=0 // pred_fallthru
    _

</llo_original>
